<compile_context>
chip_gen: v5e
topology: v5e:2x2
jax: 0.10.0
libtpu: 0.0.40
codegen_flags: <defaults>
</compile_context>

<pallas_src>
import functools

import jax
import jax.numpy as jnp
import numpy as np
from jax.experimental import pallas as pl
from jax.experimental.pallas import tpu as pltpu  # noqa: F401  (not needed at this size)

NEG_INF = -1e30


def _elu(v):
    # ELU with an expm1-accurate branch for small |v| (avoids exp(v)-1 cancellation)
    # while only using primitives guaranteed to lower in Mosaic.
    em1 = jnp.exp(v) - 1.0
    em1 = jnp.where(jnp.abs(v) < 1e-3, v + 0.5 * v * v, em1)
    return jnp.where(v > 0, v, em1)


# ----------------------------- Pallas kernel ------------------------------ #
def _edge_gat_stack_kernel(*refs, N, layer_dims):
    """All layers fused in one kernel; everything resident in VMEM.

    refs = (x, adj, ef_flat, wedge_all,
            [wnode, expand, bias] * num_layers,
            out)
    """
    x_ref, adj_ref, ef_ref, wedge_ref = refs[0], refs[1], refs[2], refs[3]
    out_ref = refs[-1]
    lrefs = refs[4:-1]

    x = x_ref[...]                                   # (N, Din) node features
    ef = ef_ref[...]                                 # (N*N, De) dense edge features
    # Additive softmax mask: computed once, reused by every layer.
    neg = jnp.where(adj_ref[...] > 0.0, 0.0, NEG_INF)[:, :, None]   # (dst, src, 1)

    # ONE MXU pass projects the (layer-invariant) edge features for ALL layers:
    # columns are [We_0 | Wea_0 | We_1 | Wea_1 | ...].
    efp = jnp.dot(ef, wedge_ref[...], preferred_element_type=jnp.float32)  # (N*N, sum_i HF_i+H_i)

    off = 0
    for li, (H, F) in enumerate(layer_dims):
        wnode, expand, bias = lrefs[3 * li:3 * li + 3]
        HF = H * F

        # Fused node-side projection: [Wfc | Wl | Wr] in a single matmul.
        xp = jnp.dot(x, wnode[...], preferred_element_type=jnp.float32)   # (N, HF+2H)
        fs = xp[:, :HF]                              # (N, HF)  projected features
        el = xp[:, HF:HF + H]                        # (N, H)   source logits
        er = xp[:, HF + H:HF + 2 * H]                # (N, H)   dest logits

        fe3 = efp[:, off:off + HF].reshape(N, N, HF)         # (dst, src, HF)
        ee3 = efp[:, off + HF:off + HF + H].reshape(N, N, H)  # (dst, src, H)
        off += HF + H

        # Attention logits + leaky_relu(0.2) + single (additive) masking mechanism.
        e3 = er[:, None, :] + el[None, :, :] + ee3   # (dst, src, H)
        e3 = jnp.where(e3 > 0, e3, 0.2 * e3)
        e3 = e3 + neg
        mx = jnp.max(e3, axis=1, keepdims=True)      # (dst, 1, H)
        p3 = jnp.exp(e3 - mx)
        a3 = p3 / jnp.sum(p3, axis=1, keepdims=True)  # edge softmax (dst, src, H)

        # Expand per-head attention across feature lanes and aggregate in one
        # fused VPU pass (node + edge message terms together).
        if H == 1:
            ae3 = a3                                 # (dst, src, 1) lane-broadcast
        else:
            ae3 = jnp.dot(a3.reshape(N * N, H), expand[...],
                          preferred_element_type=jnp.float32).reshape(N, N, HF)
        rst = jnp.sum(ae3 * (fe3 + fs[None, :, :]), axis=1)              # (N, HF)
        rst = rst + bias[...]
        x = _elu(rst)                                                    # ELU activation

    out_ref[...] = x                                 # single full-width lane-dense store


# ------------------------------ host wrapper ------------------------------- #
def _fold_params(layer_params):
    """Fold attention vectors into projection weights and fuse weight blocks (host-side, once)."""
    node_ws, expands, biases, edge_cols, dims = [], [], [], [], []
    for p in layer_params:
        H, F = p["attn_l"].shape
        din = p["wfc"].shape[0]
        de = p["we"].shape[0]
        wfc3 = p["wfc"].reshape(din, H, F)
        we3 = p["we"].reshape(de, H, F)
        wl = jnp.einsum("dhf,hf->dh", wfc3, p["attn_l"])     # (Din, H)   source logit weights
        wr = jnp.einsum("dhf,hf->dh", wfc3, p["attn_r"])     # (Din, H)   dest logit weights
        wea = jnp.einsum("dhf,hf->dh", we3, p["attn_e"])     # (De,  H)   edge logit weights
        node_ws.append(jnp.concatenate([p["wfc"], wl, wr], axis=1))   # (Din, HF+2H)
        edge_cols.append(jnp.concatenate([p["we"], wea], axis=1))     # (De,  HF+H)
        # head -> feature-lane expansion matrix (block of ones), (H, H*F)
        expands.append(jnp.repeat(jnp.eye(H, dtype=jnp.float32), F, axis=1))
        biases.append(p["bias"])
        dims.append((H, F))
    wedge_all = jnp.concatenate(edge_cols, axis=1)           # (De, sum_i HF_i+H_i)
    return wedge_all, node_ws, expands, biases, tuple(dims)


@jax.jit
def multi_layer_edge_gat(x, adj, ef_dense, layer_params):
    N = x.shape[0]
    ef_flat = ef_dense.reshape(N * N, ef_dense.shape[-1])
    wedge_all, node_ws, expands, biases, layer_dims = _fold_params(layer_params)

    args = [x, adj, ef_flat, wedge_all]
    for wn, ex, b in zip(node_ws, expands, biases):
        args.extend([wn, ex, b])

    h_last, f_last = layer_dims[-1]
    kernel = functools.partial(_edge_gat_stack_kernel, N=N, layer_dims=layer_dims)
    return pl.pallas_call(
        kernel,
        out_shape=jax.ShapeDtypeStruct((N, h_last * f_last), jnp.float32),
    )(*args)


# ------------------------- pure-JAX reference ------------------------------ #
def _ref_layer(x, adj, ef_dense, p):
    H, F = p["attn_l"].shape
    N = x.shape[0]
    fs = x @ p["wfc"]
    fs3 = fs.reshape(N, H, F)
    fe = ef_dense.reshape(N * N, -1) @ p["we"]
    fe4 = fe.reshape(N, N, H, F)
    el = (fs3 * p["attn_l"][None]).sum(-1)                  # (N, H)
    er = (fs3 * p["attn_r"][None]).sum(-1)
    ee = (fe4 * p["attn_e"][None, None]).sum(-1)            # (N, N, H)
    e = er[:, None, :] + el[None, :, :] + ee
    e = jnp.where(e > 0, e, 0.2 * e)
    mask = adj[:, :, None]
    e = jnp.where(mask > 0, e, NEG_INF)
    e = e - e.max(axis=1, keepdims=True)
    pe = jnp.exp(e) * mask
    a = pe / pe.sum(axis=1, keepdims=True)
    msg = (fs3[None, :, :, :] + fe4) * a[..., None]
    rst = msg.sum(axis=1) + p["bias"].reshape(1, H, F)
    rst = jnp.where(rst > 0, rst, jnp.expm1(rst))           # ELU
    return rst.reshape(N, H * F)


def _ref_forward(x, adj, ef_dense, layer_params):
    for p in layer_params:
        x = _ref_layer(x, adj, ef_dense, p)
    return x


# ------------------------------- params ------------------------------------ #
def init_layer(key, din, de, h, f):
    k = jax.random.split(key, 6)
    s = 0.1
    return dict(
        wfc=jax.random.normal(k[0], (din, h * f), jnp.float32) * s,
        we=jax.random.normal(k[1], (de, h * f), jnp.float32) * s,
        attn_l=jax.random.normal(k[2], (h, f), jnp.float32) * s,
        attn_r=jax.random.normal(k[3], (h, f), jnp.float32) * s,
        attn_e=jax.random.normal(k[4], (h, f), jnp.float32) * s,
        bias=jax.random.normal(k[5], (1, h * f), jnp.float32) * s,
    )


if __name__ == "__main__":
    # Module hyper-params (small, consistent with MultiLayerEdgeGAT.__init__)
    N = 8               # number of nodes
    in_feats = 16
    edge_feats = 8
    units = 32
    num_heads = 4
    num_layers = 3
    hidden = units // num_heads

    key = jax.random.PRNGKey(0)
    kx, ke, ka, kp = jax.random.split(key, 4)

    x = jax.random.normal(kx, (N, in_feats), jnp.float32)
    ef_dense = jax.random.normal(ke, (N, N, edge_feats), jnp.float32)
    adj = (jax.random.uniform(ka, (N, N)) > 0.5).astype(jnp.float32)
    adj = jnp.maximum(adj, jnp.eye(N, dtype=jnp.float32))   # self loops (in-degree >= 1)

    # layer 0: in_feats -> (num_heads, hidden); middle: units -> (num_heads, hidden);
    # last: units -> (1, units)
    dims = ([(in_feats, num_heads, hidden)]
            + [(units, num_heads, hidden) for _ in range(num_layers - 2)]
            + [(units, 1, units)])
    keys = jax.random.split(kp, len(dims))
    layer_params = [init_layer(k, din, edge_feats, h, f)
                    for k, (din, h, f) in zip(keys, dims)]

    out = multi_layer_edge_gat(x, adj, ef_dense, layer_params)
    out = jax.block_until_ready(out)

    ref = _ref_forward(x, adj, ef_dense, layer_params)
    assert out.shape == (N, units)
    np.testing.assert_allclose(np.asarray(out), np.asarray(ref),
                               rtol=1e-3, atol=1e-3)
    print("KERNEL_OK")
</pallas_src>

<mosaic_0001>
module attributes {stable_mosaic.version = 11 : i64} {
  func.func @_edge_gat_stack_kernel(%arg0: memref<8x16xf32, #tpu.memory_space<vmem>>, %arg1: memref<8x8xf32, #tpu.memory_space<vmem>>, %arg2: memref<64x8xf32, #tpu.memory_space<vmem>>, %arg3: memref<8x105xf32, #tpu.memory_space<vmem>>, %arg4: memref<16x40xf32, #tpu.memory_space<vmem>>, %arg5: memref<4x32xf32, #tpu.memory_space<vmem>>, %arg6: memref<1x32xf32, #tpu.memory_space<vmem>>, %arg7: memref<32x40xf32, #tpu.memory_space<vmem>>, %arg8: memref<4x32xf32, #tpu.memory_space<vmem>>, %arg9: memref<1x32xf32, #tpu.memory_space<vmem>>, %arg10: memref<32x34xf32, #tpu.memory_space<vmem>>, %arg11: memref<1x32xf32, #tpu.memory_space<vmem>>, %arg12: memref<1x32xf32, #tpu.memory_space<vmem>>, %arg13: memref<8x32xf32, #tpu.memory_space<vmem>>) attributes {dimension_semantics = [], scalar_prefetch = 0 : i64, scratch_operands = 0 : i64, tpu.core_type = #tpu.core_type<tc>} {
    %c0 = arith.constant 0 : index
    %c0_0 = arith.constant 0 : index
    %0 = vector.load %arg0[%c0, %c0_0] : memref<8x16xf32, #tpu.memory_space<vmem>>, vector<8x16xf32>
    %c0_1 = arith.constant 0 : index
    %c0_2 = arith.constant 0 : index
    %1 = vector.load %arg2[%c0_1, %c0_2] : memref<64x8xf32, #tpu.memory_space<vmem>>, vector<64x8xf32>
    %c0_3 = arith.constant 0 : index
    %c0_4 = arith.constant 0 : index
    %2 = vector.load %arg1[%c0_3, %c0_4] : memref<8x8xf32, #tpu.memory_space<vmem>>, vector<8x8xf32>
    %cst = arith.constant 0.000000e+00 : f32
    %3 = vector.broadcast %cst : f32 to vector<8x8xf32>
    %4 = arith.cmpf ogt, %2, %3 : vector<8x8xf32>
    %cst_5 = arith.constant 0.000000e+00 : f32
    %cst_6 = arith.constant -1.000000e+30 : f32
    %5 = vector.broadcast %cst_5 : f32 to vector<8x8xf32>
    %6 = vector.broadcast %cst_6 : f32 to vector<8x8xf32>
    %7 = arith.select %4, %5, %6 : vector<8x8xi1>, vector<8x8xf32>
    %8 = vector.shape_cast %7 : vector<8x8xf32> to vector<8x8x1xf32>
    %c0_7 = arith.constant 0 : index
    %c0_8 = arith.constant 0 : index
    %9 = vector.load %arg3[%c0_7, %c0_8] : memref<8x105xf32, #tpu.memory_space<vmem>>, vector<8x105xf32>
    %cst_9 = arith.constant dense<0.000000e+00> : vector<64x105xf32>
    %10 = tpu.matmul %1, %9, %cst_9 {dimension_numbers = #tpu.dot_dimension_numbers<[1], [0], [0], [1], [0, 0, 1, 1], [], []>} : vector<64x8xf32>, vector<8x105xf32>, vector<64x105xf32> -> vector<64x105xf32>
    %c0_10 = arith.constant 0 : index
    %c0_11 = arith.constant 0 : index
    %11 = vector.load %arg4[%c0_10, %c0_11] : memref<16x40xf32, #tpu.memory_space<vmem>>, vector<16x40xf32>
    %cst_12 = arith.constant dense<0.000000e+00> : vector<8x40xf32>
    %12 = tpu.matmul %0, %11, %cst_12 {dimension_numbers = #tpu.dot_dimension_numbers<[1], [0], [0], [1], [0, 0, 1, 1], [], []>} : vector<8x16xf32>, vector<16x40xf32>, vector<8x40xf32> -> vector<8x40xf32>
    %13 = vector.extract_strided_slice %12 {offsets = [0, 0], sizes = [8, 32], strides = [1, 1]} : vector<8x40xf32> to vector<8x32xf32>
    %14 = vector.extract_strided_slice %12 {offsets = [0, 32], sizes = [8, 4], strides = [1, 1]} : vector<8x40xf32> to vector<8x4xf32>
    %15 = vector.extract_strided_slice %12 {offsets = [0, 36], sizes = [8, 4], strides = [1, 1]} : vector<8x40xf32> to vector<8x4xf32>
    %16 = vector.extract_strided_slice %10 {offsets = [0, 0], sizes = [64, 32], strides = [1, 1]} : vector<64x105xf32> to vector<64x32xf32>
    %17 = vector.shape_cast %16 : vector<64x32xf32> to vector<8x8x32xf32>
    %18 = vector.extract_strided_slice %10 {offsets = [0, 32], sizes = [64, 4], strides = [1, 1]} : vector<64x105xf32> to vector<64x4xf32>
    %19 = vector.shape_cast %18 : vector<64x4xf32> to vector<8x8x4xf32>
    %20 = vector.shape_cast %15 : vector<8x4xf32> to vector<8x1x4xf32>
    %21 = vector.shape_cast %14 : vector<8x4xf32> to vector<1x8x4xf32>
    %22 = vector.broadcast %20 : vector<8x1x4xf32> to vector<8x8x4xf32>
    %23 = vector.broadcast %21 : vector<1x8x4xf32> to vector<8x8x4xf32>
    %24 = arith.addf %22, %23 : vector<8x8x4xf32>
    %25 = arith.addf %24, %19 : vector<8x8x4xf32>
    %cst_13 = arith.constant 0.000000e+00 : f32
    %26 = vector.broadcast %cst_13 : f32 to vector<8x8x4xf32>
    %27 = arith.cmpf ogt, %25, %26 : vector<8x8x4xf32>
    %cst_14 = arith.constant 2.000000e-01 : f32
    %28 = vector.broadcast %cst_14 : f32 to vector<8x8x4xf32>
    %29 = arith.mulf %28, %25 : vector<8x8x4xf32>
    %30 = arith.select %27, %25, %29 : vector<8x8x4xi1>, vector<8x8x4xf32>
    %31 = vector.broadcast %8 : vector<8x8x1xf32> to vector<8x8x4xf32>
    %32 = arith.addf %30, %31 : vector<8x8x4xf32>
    %cst_15 = arith.constant dense<0xFF800000> : vector<8x4xf32>
    %33 = vector.multi_reduction <maximumf>, %32, %cst_15 [1] : vector<8x8x4xf32> to vector<8x4xf32>
    %34 = vector.shape_cast %33 : vector<8x4xf32> to vector<8x1x4xf32>
    %35 = vector.broadcast %34 : vector<8x1x4xf32> to vector<8x8x4xf32>
    %36 = arith.subf %32, %35 : vector<8x8x4xf32>
    %37 = math.exp %36 : vector<8x8x4xf32>
    %cst_16 = arith.constant dense<0.000000e+00> : vector<8x4xf32>
    %38 = vector.multi_reduction <add>, %37, %cst_16 [1] : vector<8x8x4xf32> to vector<8x4xf32>
    %39 = vector.shape_cast %38 : vector<8x4xf32> to vector<8x1x4xf32>
    %40 = vector.broadcast %39 : vector<8x1x4xf32> to vector<8x8x4xf32>
    %41 = arith.divf %37, %40 : vector<8x8x4xf32>
    %42 = vector.shape_cast %41 : vector<8x8x4xf32> to vector<64x4xf32>
    %c0_17 = arith.constant 0 : index
    %c0_18 = arith.constant 0 : index
    %43 = vector.load %arg5[%c0_17, %c0_18] : memref<4x32xf32, #tpu.memory_space<vmem>>, vector<4x32xf32>
    %cst_19 = arith.constant dense<0.000000e+00> : vector<64x32xf32>
    %44 = tpu.matmul %42, %43, %cst_19 {dimension_numbers = #tpu.dot_dimension_numbers<[1], [0], [0], [1], [0, 0, 1, 1], [], []>} : vector<64x4xf32>, vector<4x32xf32>, vector<64x32xf32> -> vector<64x32xf32>
    %45 = vector.shape_cast %44 : vector<64x32xf32> to vector<8x8x32xf32>
    %46 = vector.shape_cast %13 : vector<8x32xf32> to vector<1x8x32xf32>
    %47 = vector.broadcast %46 : vector<1x8x32xf32> to vector<8x8x32xf32>
    %48 = arith.addf %17, %47 : vector<8x8x32xf32>
    %49 = arith.mulf %45, %48 : vector<8x8x32xf32>
    %cst_20 = arith.constant dense<0.000000e+00> : vector<8x32xf32>
    %50 = vector.multi_reduction <add>, %49, %cst_20 [1] : vector<8x8x32xf32> to vector<8x32xf32>
    %c0_21 = arith.constant 0 : index
    %c0_22 = arith.constant 0 : index
    %51 = vector.load %arg6[%c0_21, %c0_22] : memref<1x32xf32, #tpu.memory_space<vmem>>, vector<1x32xf32>
    %52 = vector.broadcast %51 : vector<1x32xf32> to vector<8x32xf32>
    %53 = arith.addf %50, %52 : vector<8x32xf32>
    %54 = math.exp %53 : vector<8x32xf32>
    %cst_23 = arith.constant 1.000000e+00 : f32
    %55 = vector.broadcast %cst_23 : f32 to vector<8x32xf32>
    %56 = arith.subf %54, %55 : vector<8x32xf32>
    %57 = math.absf %53 : vector<8x32xf32>
    %cst_24 = arith.constant 1.000000e-03 : f32
    %58 = vector.broadcast %cst_24 : f32 to vector<8x32xf32>
    %59 = arith.cmpf olt, %57, %58 : vector<8x32xf32>
    %cst_25 = arith.constant 5.000000e-01 : f32
    %60 = vector.broadcast %cst_25 : f32 to vector<8x32xf32>
    %61 = arith.mulf %60, %53 : vector<8x32xf32>
    %62 = arith.mulf %61, %53 : vector<8x32xf32>
    %63 = arith.addf %53, %62 : vector<8x32xf32>
    %64 = arith.select %59, %63, %56 : vector<8x32xi1>, vector<8x32xf32>
    %cst_26 = arith.constant 0.000000e+00 : f32
    %65 = vector.broadcast %cst_26 : f32 to vector<8x32xf32>
    %66 = arith.cmpf ogt, %53, %65 : vector<8x32xf32>
    %67 = arith.select %66, %53, %64 : vector<8x32xi1>, vector<8x32xf32>
    %c0_27 = arith.constant 0 : index
    %c0_28 = arith.constant 0 : index
    %68 = vector.load %arg7[%c0_27, %c0_28] : memref<32x40xf32, #tpu.memory_space<vmem>>, vector<32x40xf32>
    %cst_29 = arith.constant dense<0.000000e+00> : vector<8x40xf32>
    %69 = tpu.matmul %67, %68, %cst_29 {dimension_numbers = #tpu.dot_dimension_numbers<[1], [0], [0], [1], [0, 0, 1, 1], [], []>} : vector<8x32xf32>, vector<32x40xf32>, vector<8x40xf32> -> vector<8x40xf32>
    %70 = vector.extract_strided_slice %69 {offsets = [0, 0], sizes = [8, 32], strides = [1, 1]} : vector<8x40xf32> to vector<8x32xf32>
    %71 = vector.extract_strided_slice %69 {offsets = [0, 32], sizes = [8, 4], strides = [1, 1]} : vector<8x40xf32> to vector<8x4xf32>
    %72 = vector.extract_strided_slice %69 {offsets = [0, 36], sizes = [8, 4], strides = [1, 1]} : vector<8x40xf32> to vector<8x4xf32>
    %73 = vector.extract_strided_slice %10 {offsets = [0, 36], sizes = [64, 32], strides = [1, 1]} : vector<64x105xf32> to vector<64x32xf32>
    %74 = vector.shape_cast %73 : vector<64x32xf32> to vector<8x8x32xf32>
    %75 = vector.extract_strided_slice %10 {offsets = [0, 68], sizes = [64, 4], strides = [1, 1]} : vector<64x105xf32> to vector<64x4xf32>
    %76 = vector.shape_cast %75 : vector<64x4xf32> to vector<8x8x4xf32>
    %77 = vector.shape_cast %72 : vector<8x4xf32> to vector<8x1x4xf32>
    %78 = vector.shape_cast %71 : vector<8x4xf32> to vector<1x8x4xf32>
    %79 = vector.broadcast %77 : vector<8x1x4xf32> to vector<8x8x4xf32>
    %80 = vector.broadcast %78 : vector<1x8x4xf32> to vector<8x8x4xf32>
    %81 = arith.addf %79, %80 : vector<8x8x4xf32>
    %82 = arith.addf %81, %76 : vector<8x8x4xf32>
    %cst_30 = arith.constant 0.000000e+00 : f32
    %83 = vector.broadcast %cst_30 : f32 to vector<8x8x4xf32>
    %84 = arith.cmpf ogt, %82, %83 : vector<8x8x4xf32>
    %cst_31 = arith.constant 2.000000e-01 : f32
    %85 = vector.broadcast %cst_31 : f32 to vector<8x8x4xf32>
    %86 = arith.mulf %85, %82 : vector<8x8x4xf32>
    %87 = arith.select %84, %82, %86 : vector<8x8x4xi1>, vector<8x8x4xf32>
    %88 = vector.broadcast %8 : vector<8x8x1xf32> to vector<8x8x4xf32>
    %89 = arith.addf %87, %88 : vector<8x8x4xf32>
    %cst_32 = arith.constant dense<0xFF800000> : vector<8x4xf32>
    %90 = vector.multi_reduction <maximumf>, %89, %cst_32 [1] : vector<8x8x4xf32> to vector<8x4xf32>
    %91 = vector.shape_cast %90 : vector<8x4xf32> to vector<8x1x4xf32>
    %92 = vector.broadcast %91 : vector<8x1x4xf32> to vector<8x8x4xf32>
    %93 = arith.subf %89, %92 : vector<8x8x4xf32>
    %94 = math.exp %93 : vector<8x8x4xf32>
    %cst_33 = arith.constant dense<0.000000e+00> : vector<8x4xf32>
    %95 = vector.multi_reduction <add>, %94, %cst_33 [1] : vector<8x8x4xf32> to vector<8x4xf32>
    %96 = vector.shape_cast %95 : vector<8x4xf32> to vector<8x1x4xf32>
    %97 = vector.broadcast %96 : vector<8x1x4xf32> to vector<8x8x4xf32>
    %98 = arith.divf %94, %97 : vector<8x8x4xf32>
    %99 = vector.shape_cast %98 : vector<8x8x4xf32> to vector<64x4xf32>
    %c0_34 = arith.constant 0 : index
    %c0_35 = arith.constant 0 : index
    %100 = vector.load %arg8[%c0_34, %c0_35] : memref<4x32xf32, #tpu.memory_space<vmem>>, vector<4x32xf32>
    %cst_36 = arith.constant dense<0.000000e+00> : vector<64x32xf32>
    %101 = tpu.matmul %99, %100, %cst_36 {dimension_numbers = #tpu.dot_dimension_numbers<[1], [0], [0], [1], [0, 0, 1, 1], [], []>} : vector<64x4xf32>, vector<4x32xf32>, vector<64x32xf32> -> vector<64x32xf32>
    %102 = vector.shape_cast %101 : vector<64x32xf32> to vector<8x8x32xf32>
    %103 = vector.shape_cast %70 : vector<8x32xf32> to vector<1x8x32xf32>
    %104 = vector.broadcast %103 : vector<1x8x32xf32> to vector<8x8x32xf32>
    %105 = arith.addf %74, %104 : vector<8x8x32xf32>
    %106 = arith.mulf %102, %105 : vector<8x8x32xf32>
    %cst_37 = arith.constant dense<0.000000e+00> : vector<8x32xf32>
    %107 = vector.multi_reduction <add>, %106, %cst_37 [1] : vector<8x8x32xf32> to vector<8x32xf32>
    %c0_38 = arith.constant 0 : index
    %c0_39 = arith.constant 0 : index
    %108 = vector.load %arg9[%c0_38, %c0_39] : memref<1x32xf32, #tpu.memory_space<vmem>>, vector<1x32xf32>
    %109 = vector.broadcast %108 : vector<1x32xf32> to vector<8x32xf32>
    %110 = arith.addf %107, %109 : vector<8x32xf32>
    %111 = math.exp %110 : vector<8x32xf32>
    %cst_40 = arith.constant 1.000000e+00 : f32
    %112 = vector.broadcast %cst_40 : f32 to vector<8x32xf32>
    %113 = arith.subf %111, %112 : vector<8x32xf32>
    %114 = math.absf %110 : vector<8x32xf32>
    %cst_41 = arith.constant 1.000000e-03 : f32
    %115 = vector.broadcast %cst_41 : f32 to vector<8x32xf32>
    %116 = arith.cmpf olt, %114, %115 : vector<8x32xf32>
    %cst_42 = arith.constant 5.000000e-01 : f32
    %117 = vector.broadcast %cst_42 : f32 to vector<8x32xf32>
    %118 = arith.mulf %117, %110 : vector<8x32xf32>
    %119 = arith.mulf %118, %110 : vector<8x32xf32>
    %120 = arith.addf %110, %119 : vector<8x32xf32>
    %121 = arith.select %116, %120, %113 : vector<8x32xi1>, vector<8x32xf32>
    %cst_43 = arith.constant 0.000000e+00 : f32
    %122 = vector.broadcast %cst_43 : f32 to vector<8x32xf32>
    %123 = arith.cmpf ogt, %110, %122 : vector<8x32xf32>
    %124 = arith.select %123, %110, %121 : vector<8x32xi1>, vector<8x32xf32>
    %c0_44 = arith.constant 0 : index
    %c0_45 = arith.constant 0 : index
    %125 = vector.load %arg10[%c0_44, %c0_45] : memref<32x34xf32, #tpu.memory_space<vmem>>, vector<32x34xf32>
    %cst_46 = arith.constant dense<0.000000e+00> : vector<8x34xf32>
    %126 = tpu.matmul %124, %125, %cst_46 {dimension_numbers = #tpu.dot_dimension_numbers<[1], [0], [0], [1], [0, 0, 1, 1], [], []>} : vector<8x32xf32>, vector<32x34xf32>, vector<8x34xf32> -> vector<8x34xf32>
    %127 = vector.extract_strided_slice %126 {offsets = [0, 0], sizes = [8, 32], strides = [1, 1]} : vector<8x34xf32> to vector<8x32xf32>
    %128 = vector.extract_strided_slice %126 {offsets = [0, 32], sizes = [8, 1], strides = [1, 1]} : vector<8x34xf32> to vector<8x1xf32>
    %129 = vector.extract_strided_slice %126 {offsets = [0, 33], sizes = [8, 1], strides = [1, 1]} : vector<8x34xf32> to vector<8x1xf32>
    %130 = vector.extract_strided_slice %10 {offsets = [0, 72], sizes = [64, 32], strides = [1, 1]} : vector<64x105xf32> to vector<64x32xf32>
    %131 = vector.shape_cast %130 : vector<64x32xf32> to vector<8x8x32xf32>
    %132 = vector.extract_strided_slice %10 {offsets = [0, 104], sizes = [64, 1], strides = [1, 1]} : vector<64x105xf32> to vector<64x1xf32>
    %133 = vector.shape_cast %132 : vector<64x1xf32> to vector<8x8x1xf32>
    %134 = vector.shape_cast %129 : vector<8x1xf32> to vector<8x1x1xf32>
    %135 = vector.shape_cast %128 : vector<8x1xf32> to vector<1x8x1xf32>
    %136 = vector.broadcast %134 : vector<8x1x1xf32> to vector<8x8x1xf32>
    %137 = vector.broadcast %135 : vector<1x8x1xf32> to vector<8x8x1xf32>
    %138 = arith.addf %136, %137 : vector<8x8x1xf32>
    %139 = arith.addf %138, %133 : vector<8x8x1xf32>
    %cst_47 = arith.constant 0.000000e+00 : f32
    %140 = vector.broadcast %cst_47 : f32 to vector<8x8x1xf32>
    %141 = arith.cmpf ogt, %139, %140 : vector<8x8x1xf32>
    %cst_48 = arith.constant 2.000000e-01 : f32
    %142 = vector.broadcast %cst_48 : f32 to vector<8x8x1xf32>
    %143 = arith.mulf %142, %139 : vector<8x8x1xf32>
    %144 = arith.select %141, %139, %143 : vector<8x8x1xi1>, vector<8x8x1xf32>
    %145 = arith.addf %144, %8 : vector<8x8x1xf32>
    %cst_49 = arith.constant dense<0xFF800000> : vector<8x1xf32>
    %146 = vector.multi_reduction <maximumf>, %145, %cst_49 [1] : vector<8x8x1xf32> to vector<8x1xf32>
    %147 = vector.shape_cast %146 : vector<8x1xf32> to vector<8x1x1xf32>
    %148 = vector.broadcast %147 : vector<8x1x1xf32> to vector<8x8x1xf32>
    %149 = arith.subf %145, %148 : vector<8x8x1xf32>
    %150 = math.exp %149 : vector<8x8x1xf32>
    %cst_50 = arith.constant dense<0.000000e+00> : vector<8x1xf32>
    %151 = vector.multi_reduction <add>, %150, %cst_50 [1] : vector<8x8x1xf32> to vector<8x1xf32>
    %152 = vector.shape_cast %151 : vector<8x1xf32> to vector<8x1x1xf32>
    %153 = vector.broadcast %152 : vector<8x1x1xf32> to vector<8x8x1xf32>
    %154 = arith.divf %150, %153 : vector<8x8x1xf32>
    %155 = vector.shape_cast %127 : vector<8x32xf32> to vector<1x8x32xf32>
    %156 = vector.broadcast %155 : vector<1x8x32xf32> to vector<8x8x32xf32>
    %157 = arith.addf %131, %156 : vector<8x8x32xf32>
    %158 = vector.broadcast %154 : vector<8x8x1xf32> to vector<8x8x32xf32>
    %159 = arith.mulf %158, %157 : vector<8x8x32xf32>
    %cst_51 = arith.constant dense<0.000000e+00> : vector<8x32xf32>
    %160 = vector.multi_reduction <add>, %159, %cst_51 [1] : vector<8x8x32xf32> to vector<8x32xf32>
    %c0_52 = arith.constant 0 : index
    %c0_53 = arith.constant 0 : index
    %161 = vector.load %arg12[%c0_52, %c0_53] : memref<1x32xf32, #tpu.memory_space<vmem>>, vector<1x32xf32>
    %162 = vector.broadcast %161 : vector<1x32xf32> to vector<8x32xf32>
    %163 = arith.addf %160, %162 : vector<8x32xf32>
    %164 = math.exp %163 : vector<8x32xf32>
    %cst_54 = arith.constant 1.000000e+00 : f32
    %165 = vector.broadcast %cst_54 : f32 to vector<8x32xf32>
    %166 = arith.subf %164, %165 : vector<8x32xf32>
    %167 = math.absf %163 : vector<8x32xf32>
    %cst_55 = arith.constant 1.000000e-03 : f32
    %168 = vector.broadcast %cst_55 : f32 to vector<8x32xf32>
    %169 = arith.cmpf olt, %167, %168 : vector<8x32xf32>
    %cst_56 = arith.constant 5.000000e-01 : f32
    %170 = vector.broadcast %cst_56 : f32 to vector<8x32xf32>
    %171 = arith.mulf %170, %163 : vector<8x32xf32>
    %172 = arith.mulf %171, %163 : vector<8x32xf32>
    %173 = arith.addf %163, %172 : vector<8x32xf32>
    %174 = arith.select %169, %173, %166 : vector<8x32xi1>, vector<8x32xf32>
    %cst_57 = arith.constant 0.000000e+00 : f32
    %175 = vector.broadcast %cst_57 : f32 to vector<8x32xf32>
    %176 = arith.cmpf ogt, %163, %175 : vector<8x32xf32>
    %177 = arith.select %176, %163, %174 : vector<8x32xi1>, vector<8x32xf32>
    %c0_58 = arith.constant 0 : index
    %c0_59 = arith.constant 0 : index
    %178 = vector.load %arg13[%c0_58, %c0_59] : memref<8x32xf32, #tpu.memory_space<vmem>>, vector<8x32xf32>
    tpu.vector_store %arg13[%c0_58, %c0_59], %177 {strides = array<i32>} : memref<8x32xf32, #tpu.memory_space<vmem>>, vector<8x32xf32>,
    return
  }
}

</mosaic_0001>

<llo_original>
// kernel: multi_layer_edge_gat.1
$region0: #{multi_layer_edge_gat.1}
  #allocation0 [shape = 'u32[]', space=smem, size = 0x4, offset = 0x4, fixed_abs, tag = 'smem constant byte address 0x4 - core index']
  #allocation1 [shape = 'u32[72,128]{1,0:T(1,128)}', space=vmem, size = 0x9000, scoped, tag = 'internal scratch']
  %s0 = inlined_call_operand.vmem [shape: f32[8,16], index: 0, kind: input, shape index: {}]
  %s1 = inlined_call_operand.vmem [shape: f32[8,8], index: 1, kind: input, shape index: {}]
  %s2 = inlined_call_operand.vmem [shape: f32[64,8], index: 2, kind: input, shape index: {}]
  %s3 = inlined_call_operand.vmem [shape: f32[8,105], index: 3, kind: input, shape index: {}]
  %s4 = inlined_call_operand.vmem [shape: f32[16,40], index: 4, kind: input, shape index: {}]
  %s5 = inlined_call_operand.vmem [shape: f32[4,32], index: 5, kind: input, shape index: {}, may-alias: {5,8}]
  %s6 = inlined_call_operand.vmem [shape: f32[1,32], index: 6, kind: input, shape index: {}]
  %s7 = inlined_call_operand.vmem [shape: f32[32,40], index: 7, kind: input, shape index: {}]
  %s8 = inlined_call_operand.vmem [shape: f32[4,32], index: 8, kind: input, shape index: {}, may-alias: {5,8}]
  %s9 = inlined_call_operand.vmem [shape: f32[1,32], index: 9, kind: input, shape index: {}]
  %s10 = inlined_call_operand.vmem [shape: f32[32,34], index: 10, kind: input, shape index: {}]
  %s11 = inlined_call_operand.vmem [shape: f32[1,32], index: 11, kind: input, shape index: {}]
  %s12 = inlined_call_operand.vmem [shape: f32[1,32], index: 12, kind: input, shape index: {}]
  %s13 = inlined_call_operand.hbm [shape: f32[8,32], index: 13, kind: output, shape index: {}]
  %s14 = sld [smem:[#allocation0]]
  $region62: #{multi_layer_edge_gat.1} parent=0
    _
  %s16 = ssub.s32 1, %s14
  %s17 = scalar_select 0, %s16, %s14
  $region1: #{multi_layer_edge_gat.1} parent=0
    #allocation2 [shape = 'u8[4096]{0}', space=vmem, size = 0x1000, scoped, tag = 'output window, operand 0, single buffered']
    #allocation3 [shape = 's32[1]{0}', space=sflag, size = 0x4, scoped, tag = 'scoped memory for multi_layer_edge_gat.1']
    %18 = vsyncpa [#allocation3], 0
    // Predicated region
    $region2: #{multi_layer_edge_gat.1} parent=1 // pred_check
      _
    $region3: #{multi_layer_edge_gat.1} parent=1 // pred_check_branch
      %20 = sbr.rel (0) target = $region5
    $region4: #{multi_layer_edge_gat.1} parent=1 // pred_region
      _
    $region5: #{multi_layer_edge_gat.1} parent=1 // pred_fallthru
      _
    // Predicated region
    $region6: #{multi_layer_edge_gat.1} parent=1 // pred_check
      _
    $region7: #{multi_layer_edge_gat.1} parent=1 // pred_check_branch
      %22 = sbr.rel (0) target = $region9
    $region8: #{multi_layer_edge_gat.1} parent=1 // pred_region
      _
    $region9: #{multi_layer_edge_gat.1} parent=1 // pred_fallthru
      _
    // Predicated region
    $region10: #{multi_layer_edge_gat.1} parent=1 // pred_check
      _
    $region11: #{multi_layer_edge_gat.1} parent=1 // pred_check_branch
      %24 = sbr.rel (0) target = $region13
    $region12: #{multi_layer_edge_gat.1} parent=1 // pred_region
      _
    $region13: #{multi_layer_edge_gat.1} parent=1 // pred_fallthru
      _
    // Predicated region
    $region14: #{multi_layer_edge_gat.1} parent=1 // pred_check
      _
    $region15: #{multi_layer_edge_gat.1} parent=1 // pred_check_branch
      %26 = sbr.rel (0) target = $region17
    $region16: #{multi_layer_edge_gat.1} parent=1 // pred_region
      _
    $region17: #{multi_layer_edge_gat.1} parent=1 // pred_fallthru
      _
    // Predicated region
    $region18: #{multi_layer_edge_gat.1} parent=1 // pred_check
      _
    $region19: #{multi_layer_edge_gat.1} parent=1 // pred_check_branch
      %28 = sbr.rel (0) target = $region21
    $region20: #{multi_layer_edge_gat.1} parent=1 // pred_region
      _
    $region21: #{multi_layer_edge_gat.1} parent=1 // pred_fallthru
      _
    // Predicated region
    $region22: #{multi_layer_edge_gat.1} parent=1 // pred_check
      _
    $region23: #{multi_layer_edge_gat.1} parent=1 // pred_check_branch
      %30 = sbr.rel (0) target = $region25
    $region24: #{multi_layer_edge_gat.1} parent=1 // pred_region
      _
    $region25: #{multi_layer_edge_gat.1} parent=1 // pred_fallthru
      _
    // Predicated region
    $region26: #{multi_layer_edge_gat.1} parent=1 // pred_check
      _
    $region27: #{multi_layer_edge_gat.1} parent=1 // pred_check_branch
      %32 = sbr.rel (0) target = $region29
    $region28: #{multi_layer_edge_gat.1} parent=1 // pred_region
      _
    $region29: #{multi_layer_edge_gat.1} parent=1 // pred_fallthru
      _
    // Predicated region
    $region30: #{multi_layer_edge_gat.1} parent=1 // pred_check
      _
    $region31: #{multi_layer_edge_gat.1} parent=1 // pred_check_branch
      %34 = sbr.rel (0) target = $region33
    $region32: #{multi_layer_edge_gat.1} parent=1 // pred_region
      _
    $region33: #{multi_layer_edge_gat.1} parent=1 // pred_fallthru
      _
    // Predicated region
    $region34: #{multi_layer_edge_gat.1} parent=1 // pred_check
      _
    $region35: #{multi_layer_edge_gat.1} parent=1 // pred_check_branch
      %36 = sbr.rel (0) target = $region37
    $region36: #{multi_layer_edge_gat.1} parent=1 // pred_region
      _
    $region37: #{multi_layer_edge_gat.1} parent=1 // pred_fallthru
      _
    // Predicated region
    $region38: #{multi_layer_edge_gat.1} parent=1 // pred_check
      _
    $region39: #{multi_layer_edge_gat.1} parent=1 // pred_check_branch
      %38 = sbr.rel (0) target = $region41
    $region40: #{multi_layer_edge_gat.1} parent=1 // pred_region
      _
    $region41: #{multi_layer_edge_gat.1} parent=1 // pred_fallthru
      _
    // Predicated region
    $region42: #{multi_layer_edge_gat.1} parent=1 // pred_check
      _
    $region43: #{multi_layer_edge_gat.1} parent=1 // pred_check_branch
      %40 = sbr.rel (0) target = $region45
    $region44: #{multi_layer_edge_gat.1} parent=1 // pred_region
      _
    $region45: #{multi_layer_edge_gat.1} parent=1 // pred_fallthru
      _
    // Predicated region
    $region46: #{multi_layer_edge_gat.1} parent=1 // pred_check
      _
    $region47: #{multi_layer_edge_gat.1} parent=1 // pred_check_branch
      %42 = sbr.rel (0) target = $region49
    $region48: #{multi_layer_edge_gat.1} parent=1 // pred_region
      _
    $region49: #{multi_layer_edge_gat.1} parent=1 // pred_fallthru
      _
    // Predicated region
    $region50: #{multi_layer_edge_gat.1} parent=1 // pred_check
      _
    $region51: #{multi_layer_edge_gat.1} parent=1 // pred_check_branch
      %44 = sbr.rel (0) target = $region53
    $region52: #{multi_layer_edge_gat.1} parent=1 // pred_region
      _
    $region53: #{multi_layer_edge_gat.1} parent=1 // pred_fallthru
      _
    %v45 = vld [vmem:[%s0] sm:$0xff]
    %v46 = vld [vmem:[%s2] sm:$0xff]
    %v47 = vld [vmem:[%s2 + $0x8] sm:$0xff]
    %v48 = vld [vmem:[%s2 + $0x10] sm:$0xff]
    %v49 = vld [vmem:[%s2 + $0x18] sm:$0xff]
    %v50 = vld [vmem:[%s2 + $0x20] sm:$0xff]
    %v51 = vld [vmem:[%s2 + $0x28] sm:$0xff]
    %v52 = vld [vmem:[%s2 + $0x30] sm:$0xff]
    %v53 = vld [vmem:[%s2 + $0x38] sm:$0xff]
    %v54 = vld [vmem:[%s1] sm:$0xff]
    %vm55 = vcmp.gt.f32.partialorder %v54, 0.0
    %v56 = vsel %vm55, 0.0, -1e+30
    %v57 = vperm.slane %v56, 0
    %v58 = vlaneseq
    %v59 = vshrl.u32 %v58, 7
    %61 = vset.pattern.permute.xlu0 %v59
    %62 = vperm.xlu0 %61, %v57
    %v63 = vpop.permute.xlu0 %62
    %v64 = vperm.slane %v56, 1
    %v65 = vlaneseq
    %v66 = vshrl.u32 %v65, 7
    %68 = vset.pattern.permute.xlu0 %v66
    %69 = vperm.xlu0 %68, %v64
    %v70 = vpop.permute.xlu0 %69
    %v71 = vperm.slane %v56, 2
    %v72 = vlaneseq
    %v73 = vshrl.u32 %v72, 7
    %75 = vset.pattern.permute.xlu0 %v73
    %76 = vperm.xlu0 %75, %v71
    %v77 = vpop.permute.xlu0 %76
    %v78 = vperm.slane %v56, 3
    %v79 = vlaneseq
    %v80 = vshrl.u32 %v79, 7
    %82 = vset.pattern.permute.xlu0 %v80
    %83 = vperm.xlu0 %82, %v78
    %v84 = vpop.permute.xlu0 %83
    %v85 = vperm.slane %v56, 4
    %v86 = vlaneseq
    %v87 = vshrl.u32 %v86, 7
    %89 = vset.pattern.permute.xlu0 %v87
    %90 = vperm.xlu0 %89, %v85
    %v91 = vpop.permute.xlu0 %90
    %v92 = vperm.slane %v56, 5
    %v93 = vlaneseq
    %v94 = vshrl.u32 %v93, 7
    %96 = vset.pattern.permute.xlu0 %v94
    %97 = vperm.xlu0 %96, %v92
    %v98 = vpop.permute.xlu0 %97
    %v99 = vperm.slane %v56, 6
    %v100 = vlaneseq
    %v101 = vshrl.u32 %v100, 7
    %103 = vset.pattern.permute.xlu0 %v101
    %104 = vperm.xlu0 %103, %v99
    %v105 = vpop.permute.xlu0 %104
    %v106 = vperm.slane %v56, 7
    %v107 = vlaneseq
    %v108 = vshrl.u32 %v107, 7
    %110 = vset.pattern.permute.xlu0 %v108
    %111 = vperm.xlu0 %110, %v106
    %v112 = vpop.permute.xlu0 %111
    %v113 = vld [vmem:[%s3] sm:$0xff]
    %vm114 = vcmask 64512
    %v116 = vsel %vm114, %v46, 0
    %v119 = vsel %vm114, %v47, 0
    %v122 = vsel %vm114, %v48, 0
    %v125 = vsel %vm114, %v49, 0
    %v128 = vsel %vm114, %v50, 0
    %v131 = vsel %vm114, %v51, 0
    %v134 = vsel %vm114, %v52, 0
    %v137 = vsel %vm114, %v53, 0
    %139 = vmatpush.msra.mxu0 0.0
    %140 = vmatpush.msra.mxu0 0.0
    %141 = vmatpush.msra.mxu0 0.0
    %142 = vmatpush.msra.mxu0 0.0
    %143 = vmatpush.msra.mxu0 0.0
    %144 = vmatpush.msra.mxu0 0.0
    %145 = vmatpush.msra.mxu0 0.0
    %146 = vmatpush.msra.mxu0 0.0
    %147 = vmatpush.msra.mxu0 0.0
    %148 = vmatpush.msra.mxu0 0.0
    %149 = vmatpush.msra.mxu0 0.0
    %150 = vmatpush.msra.mxu0 0.0
    %151 = vmatpush.msra.mxu0 0.0
    %152 = vmatpush.msra.mxu0 0.0
    %153 = vmatpush.msra.mxu0 0.0
    %154 = vmatpush.msra.mxu0 %v113
    %155 = vmatmul.f32.gmra.mxu0 %v116
    %v156 = vpop.f32.mrf.mxu0
    %v157 = vadd.f32 0.0, %v156
    %158 = vmatmul.f32.gmra.mxu0 %v119
    %v159 = vpop.f32.mrf.mxu0
    %v160 = vadd.f32 0.0, %v159
    %161 = vmatmul.f32.gmra.mxu0 %v122
    %v162 = vpop.f32.mrf.mxu0
    %v163 = vadd.f32 0.0, %v162
    %164 = vmatmul.f32.gmra.mxu0 %v125
    %v165 = vpop.f32.mrf.mxu0
    %v166 = vadd.f32 0.0, %v165
    %167 = vmatmul.f32.gmra.mxu0 %v128
    %v168 = vpop.f32.mrf.mxu0
    %v169 = vadd.f32 0.0, %v168
    %170 = vmatmul.f32.gmra.mxu0 %v131
    %v171 = vpop.f32.mrf.mxu0
    %v172 = vadd.f32 0.0, %v171
    %173 = vmatmul.f32.gmra.mxu0 %v134
    %v174 = vpop.f32.mrf.mxu0
    %v175 = vadd.f32 0.0, %v174
    %176 = vmatmul.f32.gmra.mxu0 %v137
    %v177 = vpop.f32.mrf.mxu0
    %v178 = vadd.f32 0.0, %v177
    %179 = vdwg.mxu0
    %v180 = vld [vmem:[%s4] sm:$0xff]
    %v181 = vld [vmem:[%s4 + $0x8] sm:$0xff]
    %vm182 = vcmask 130048
    %v184 = vsel %vm182, %v45, 0
    %186 = vmatpush.msra.mxu0 0.0
    %187 = vmatpush.msra.mxu0 0.0
    %188 = vmatpush.msra.mxu0 0.0
    %189 = vmatpush.msra.mxu0 0.0
    %190 = vmatpush.msra.mxu0 0.0
    %191 = vmatpush.msra.mxu0 0.0
    %192 = vmatpush.msra.mxu0 0.0
    %193 = vmatpush.msra.mxu0 0.0
    %194 = vmatpush.msra.mxu0 0.0
    %195 = vmatpush.msra.mxu0 0.0
    %196 = vmatpush.msra.mxu0 0.0
    %197 = vmatpush.msra.mxu0 0.0
    %198 = vmatpush.msra.mxu0 0.0
    %199 = vmatpush.msra.mxu0 0.0
    %200 = vmatpush.msra.mxu0 %v181
    %201 = vmatpush.msra.mxu0 %v180
    %202 = vmatmul.f32.gmra.mxu0 %v184
    %v203 = vpop.f32.mrf.mxu0
    %v204 = vadd.f32 0.0, %v203
    %205 = vdwg.mxu0
    %v207 = vrot.slane %v204, 1
    %v208 = vrot.slane %v204, 2
    %v209 = vrot.slane %v204, 3
    %v210 = vrot.slane %v204, 4
    %v211 = vrot.slane %v204, 5
    %v212 = vrot.slane %v204, 6
    %v213 = vrot.slane %v204, 7
    %v214 = vperm.slane %v204, 0
    %v215 = vperm.slane %v207, 0
    %v216 = vperm.slane %v208, 0
    %v217 = vperm.slane %v209, 0
    %v218 = vperm.slane %v210, 0
    %v219 = vperm.slane %v211, 0
    %v220 = vperm.slane %v212, 0
    %v221 = vperm.slane %v213, 0
    %230 = vrot.lane.b32.xlu0 %v204, 4
    %v231 = vpop.permute.xlu0 %230
    %v233 = vadd.f32 %v214, %v231
    %v234 = vadd.f32 %v215, %v231
    %v235 = vadd.f32 %v216, %v231
    %v236 = vadd.f32 %v217, %v231
    %v237 = vadd.f32 %v218, %v231
    %v238 = vadd.f32 %v219, %v231
    %v239 = vadd.f32 %v220, %v231
    %v240 = vadd.f32 %v221, %v231
    %249 = vrot.lane.b32.xlu0 %v157, 4
    %v250 = vpop.permute.xlu0 %249
    %251 = vrot.lane.b32.xlu0 %v160, 4
    %v252 = vpop.permute.xlu0 %251
    %253 = vrot.lane.b32.xlu0 %v163, 4
    %v254 = vpop.permute.xlu0 %253
    %255 = vrot.lane.b32.xlu0 %v166, 4
    %v256 = vpop.permute.xlu0 %255
    %257 = vrot.lane.b32.xlu0 %v169, 4
    %v258 = vpop.permute.xlu0 %257
    %259 = vrot.lane.b32.xlu0 %v172, 4
    %v260 = vpop.permute.xlu0 %259
    %261 = vrot.lane.b32.xlu0 %v175, 4
    %v262 = vpop.permute.xlu0 %261
    %263 = vrot.lane.b32.xlu0 %v178, 4
    %v264 = vpop.permute.xlu0 %263
    %v273 = vadd.f32 %v233, %v250
    %v274 = vadd.f32 %v234, %v252
    %v275 = vadd.f32 %v235, %v254
    %v276 = vadd.f32 %v236, %v256
    %v277 = vadd.f32 %v237, %v258
    %v278 = vadd.f32 %v238, %v260
    %v279 = vadd.f32 %v239, %v262
    %v280 = vadd.f32 %v240, %v264
    %vm281 = vcmp.gt.f32.partialorder %v273, 0.0
    %vm282 = vcmp.gt.f32.partialorder %v274, 0.0
    %vm283 = vcmp.gt.f32.partialorder %v275, 0.0
    %vm284 = vcmp.gt.f32.partialorder %v276, 0.0
    %vm285 = vcmp.gt.f32.partialorder %v277, 0.0
    %vm286 = vcmp.gt.f32.partialorder %v278, 0.0
    %vm287 = vcmp.gt.f32.partialorder %v279, 0.0
    %vm288 = vcmp.gt.f32.partialorder %v280, 0.0
    %v289 = vmul.f32 %v273, 0.2
    %v290 = vmul.f32 %v274, 0.2
    %v291 = vmul.f32 %v275, 0.2
    %v292 = vmul.f32 %v276, 0.2
    %v293 = vmul.f32 %v277, 0.2
    %v294 = vmul.f32 %v278, 0.2
    %v295 = vmul.f32 %v279, 0.2
    %v296 = vmul.f32 %v280, 0.2
    %v297 = vsel %vm281, %v273, %v289
    %v298 = vsel %vm282, %v274, %v290
    %v299 = vsel %vm283, %v275, %v291
    %v300 = vsel %vm284, %v276, %v292
    %v301 = vsel %vm285, %v277, %v293
    %v302 = vsel %vm286, %v278, %v294
    %v303 = vsel %vm287, %v279, %v295
    %v304 = vsel %vm288, %v280, %v296
    %v305 = vadd.f32 %v297, %v63
    %v306 = vadd.f32 %v298, %v70
    %v307 = vadd.f32 %v299, %v77
    %v308 = vadd.f32 %v300, %v84
    %v309 = vadd.f32 %v301, %v91
    %v310 = vadd.f32 %v302, %v98
    %v311 = vadd.f32 %v303, %v105
    %v312 = vadd.f32 %v304, %v112
    %vm313 = vcmask 326944
    %v314 = vsel %vm313, %v305, -inf
    %v315 = vrot.slane %v314, 4
    %v316 = vmax.f32 %v314, %v315
    %v317 = vrot.slane %v316, 2
    %v318 = vmax.f32 %v316, %v317
    %v319 = vrot.slane %v318, 1
    %v320 = vmax.f32 %v318, %v319
    %v321 = vsel %vm313, %v306, -inf
    %v322 = vrot.slane %v321, 4
    %v323 = vmax.f32 %v321, %v322
    %v324 = vrot.slane %v323, 2
    %v325 = vmax.f32 %v323, %v324
    %v326 = vrot.slane %v325, 1
    %v327 = vmax.f32 %v325, %v326
    %v328 = vsel %vm313, %v307, -inf
    %v329 = vrot.slane %v328, 4
    %v330 = vmax.f32 %v328, %v329
    %v331 = vrot.slane %v330, 2
    %v332 = vmax.f32 %v330, %v331
    %v333 = vrot.slane %v332, 1
    %v334 = vmax.f32 %v332, %v333
    %v335 = vsel %vm313, %v308, -inf
    %v336 = vrot.slane %v335, 4
    %v337 = vmax.f32 %v335, %v336
    %v338 = vrot.slane %v337, 2
    %v339 = vmax.f32 %v337, %v338
    %v340 = vrot.slane %v339, 1
    %v341 = vmax.f32 %v339, %v340
    %v342 = vsel %vm313, %v309, -inf
    %v343 = vrot.slane %v342, 4
    %v344 = vmax.f32 %v342, %v343
    %v345 = vrot.slane %v344, 2
    %v346 = vmax.f32 %v344, %v345
    %v347 = vrot.slane %v346, 1
    %v348 = vmax.f32 %v346, %v347
    %v349 = vsel %vm313, %v310, -inf
    %v350 = vrot.slane %v349, 4
    %v351 = vmax.f32 %v349, %v350
    %v352 = vrot.slane %v351, 2
    %v353 = vmax.f32 %v351, %v352
    %v354 = vrot.slane %v353, 1
    %v355 = vmax.f32 %v353, %v354
    %v356 = vsel %vm313, %v311, -inf
    %v357 = vrot.slane %v356, 4
    %v358 = vmax.f32 %v356, %v357
    %v359 = vrot.slane %v358, 2
    %v360 = vmax.f32 %v358, %v359
    %v361 = vrot.slane %v360, 1
    %v362 = vmax.f32 %v360, %v361
    %v363 = vsel %vm313, %v312, -inf
    %v364 = vrot.slane %v363, 4
    %v365 = vmax.f32 %v363, %v364
    %v366 = vrot.slane %v365, 2
    %v367 = vmax.f32 %v365, %v366
    %v368 = vrot.slane %v367, 1
    %v369 = vmax.f32 %v367, %v368
    %v370 = vsub.f32 %v305, %v320
    %v371 = vsub.f32 %v306, %v327
    %v372 = vsub.f32 %v307, %v334
    %v373 = vsub.f32 %v308, %v341
    %v374 = vsub.f32 %v309, %v348
    %v375 = vsub.f32 %v310, %v355
    %v376 = vsub.f32 %v311, %v362
    %v377 = vsub.f32 %v312, %v369
    %v378 = vmul.f32 %v370, 1.442695
    %v379 = vpow.pop %v378
    %v380 = vmul.f32 %v371, 1.442695
    %v381 = vpow.pop %v380
    %v382 = vmul.f32 %v372, 1.442695
    %v383 = vpow.pop %v382
    %v384 = vmul.f32 %v373, 1.442695
    %v385 = vpow.pop %v384
    %v386 = vmul.f32 %v374, 1.442695
    %v387 = vpow.pop %v386
    %v388 = vmul.f32 %v375, 1.442695
    %v389 = vpow.pop %v388
    %v390 = vmul.f32 %v376, 1.442695
    %v391 = vpow.pop %v390
    %v392 = vmul.f32 %v377, 1.442695
    %v393 = vpow.pop %v392
    %v394 = vsel %vm313, %v379, 0.0
    %v395 = vrot.slane %v394, 4
    %v396 = vadd.f32 %v394, %v395
    %v397 = vrot.slane %v396, 2
    %v398 = vadd.f32 %v396, %v397
    %v399 = vrot.slane %v398, 1
    %v400 = vadd.f32 %v398, %v399
    %v401 = vsel %vm313, %v381, 0.0
    %v402 = vrot.slane %v401, 4
    %v403 = vadd.f32 %v401, %v402
    %v404 = vrot.slane %v403, 2
    %v405 = vadd.f32 %v403, %v404
    %v406 = vrot.slane %v405, 1
    %v407 = vadd.f32 %v405, %v406
    %v408 = vsel %vm313, %v383, 0.0
    %v409 = vrot.slane %v408, 4
    %v410 = vadd.f32 %v408, %v409
    %v411 = vrot.slane %v410, 2
    %v412 = vadd.f32 %v410, %v411
    %v413 = vrot.slane %v412, 1
    %v414 = vadd.f32 %v412, %v413
    %v415 = vsel %vm313, %v385, 0.0
    %v416 = vrot.slane %v415, 4
    %v417 = vadd.f32 %v415, %v416
    %v418 = vrot.slane %v417, 2
    %v419 = vadd.f32 %v417, %v418
    %v420 = vrot.slane %v419, 1
    %v421 = vadd.f32 %v419, %v420
    %v422 = vsel %vm313, %v387, 0.0
    %v423 = vrot.slane %v422, 4
    %v424 = vadd.f32 %v422, %v423
    %v425 = vrot.slane %v424, 2
    %v426 = vadd.f32 %v424, %v425
    %v427 = vrot.slane %v426, 1
    %v428 = vadd.f32 %v426, %v427
    %v429 = vsel %vm313, %v389, 0.0
    %v430 = vrot.slane %v429, 4
    %v431 = vadd.f32 %v429, %v430
    %v432 = vrot.slane %v431, 2
    %v433 = vadd.f32 %v431, %v432
    %v434 = vrot.slane %v433, 1
    %v435 = vadd.f32 %v433, %v434
    %v436 = vsel %vm313, %v391, 0.0
    %v437 = vrot.slane %v436, 4
    %v438 = vadd.f32 %v436, %v437
    %v439 = vrot.slane %v438, 2
    %v440 = vadd.f32 %v438, %v439
    %v441 = vrot.slane %v440, 1
    %v442 = vadd.f32 %v440, %v441
    %v443 = vsel %vm313, %v393, 0.0
    %v444 = vrot.slane %v443, 4
    %v445 = vadd.f32 %v443, %v444
    %v446 = vrot.slane %v445, 2
    %v447 = vadd.f32 %v445, %v446
    %v448 = vrot.slane %v447, 1
    %v449 = vadd.f32 %v447, %v448
    %v450 = vrcp.pop %v400
    %v451 = vmul.f32 %v400, %v450
    %v452 = vsub.f32 1.0, %v451
    %v453 = vmul.f32 %v450, %v452
    %v454 = vadd.f32 %v450, %v453
    %vm455 = vweird.f32 %v400
    %vm456 = vweird.f32 %v450
    %vm457 = vmor %vm455, %vm456
    %v458 = vsel %vm457, %v450, %v454
    %v459 = vand.u32 2147483647, %v400
    %vm460 = vcmp.eq.f32.partialorder %v459, 8.507059e+37
    %v461 = vand.u32 %v400, 2147483648
    %v462 = vor.u32 1.1754944e-38, %v461
    %v463 = vsel %vm460, %v462, %v458
    %v464 = vmul.f32 %v379, %v463
    %v465 = vrcp.pop %v407
    %v466 = vmul.f32 %v407, %v465
    %v467 = vsub.f32 1.0, %v466
    %v468 = vmul.f32 %v465, %v467
    %v469 = vadd.f32 %v465, %v468
    %vm470 = vweird.f32 %v407
    %vm471 = vweird.f32 %v465
    %vm472 = vmor %vm470, %vm471
    %v473 = vsel %vm472, %v465, %v469
    %v474 = vand.u32 2147483647, %v407
    %vm475 = vcmp.eq.f32.partialorder %v474, 8.507059e+37
    %v476 = vand.u32 %v407, 2147483648
    %v477 = vor.u32 1.1754944e-38, %v476
    %v478 = vsel %vm475, %v477, %v473
    %v479 = vmul.f32 %v381, %v478
    %v480 = vrcp.pop %v414
    %v481 = vmul.f32 %v414, %v480
    %v482 = vsub.f32 1.0, %v481
    %v483 = vmul.f32 %v480, %v482
    %v484 = vadd.f32 %v480, %v483
    %vm485 = vweird.f32 %v414
    %vm486 = vweird.f32 %v480
    %vm487 = vmor %vm485, %vm486
    %v488 = vsel %vm487, %v480, %v484
    %v489 = vand.u32 2147483647, %v414
    %vm490 = vcmp.eq.f32.partialorder %v489, 8.507059e+37
    %v491 = vand.u32 %v414, 2147483648
    %v492 = vor.u32 1.1754944e-38, %v491
    %v493 = vsel %vm490, %v492, %v488
    %v494 = vmul.f32 %v383, %v493
    %v495 = vrcp.pop %v421
    %v496 = vmul.f32 %v421, %v495
    %v497 = vsub.f32 1.0, %v496
    %v498 = vmul.f32 %v495, %v497
    %v499 = vadd.f32 %v495, %v498
    %vm500 = vweird.f32 %v421
    %vm501 = vweird.f32 %v495
    %vm502 = vmor %vm500, %vm501
    %v503 = vsel %vm502, %v495, %v499
    %v504 = vand.u32 2147483647, %v421
    %vm505 = vcmp.eq.f32.partialorder %v504, 8.507059e+37
    %v506 = vand.u32 %v421, 2147483648
    %v507 = vor.u32 1.1754944e-38, %v506
    %v508 = vsel %vm505, %v507, %v503
    %v509 = vmul.f32 %v385, %v508
    %v510 = vrcp.pop %v428
    %v511 = vmul.f32 %v428, %v510
    %v512 = vsub.f32 1.0, %v511
    %v513 = vmul.f32 %v510, %v512
    %v514 = vadd.f32 %v510, %v513
    %vm515 = vweird.f32 %v428
    %vm516 = vweird.f32 %v510
    %vm517 = vmor %vm515, %vm516
    %v518 = vsel %vm517, %v510, %v514
    %v519 = vand.u32 2147483647, %v428
    %vm520 = vcmp.eq.f32.partialorder %v519, 8.507059e+37
    %v521 = vand.u32 %v428, 2147483648
    %v522 = vor.u32 1.1754944e-38, %v521
    %v523 = vsel %vm520, %v522, %v518
    %v524 = vmul.f32 %v387, %v523
    %v525 = vrcp.pop %v435
    %v526 = vmul.f32 %v435, %v525
    %v527 = vsub.f32 1.0, %v526
    %v528 = vmul.f32 %v525, %v527
    %v529 = vadd.f32 %v525, %v528
    %vm530 = vweird.f32 %v435
    %vm531 = vweird.f32 %v525
    %vm532 = vmor %vm530, %vm531
    %v533 = vsel %vm532, %v525, %v529
    %v534 = vand.u32 2147483647, %v435
    %vm535 = vcmp.eq.f32.partialorder %v534, 8.507059e+37
    %v536 = vand.u32 %v435, 2147483648
    %v537 = vor.u32 1.1754944e-38, %v536
    %v538 = vsel %vm535, %v537, %v533
    %v539 = vmul.f32 %v389, %v538
    %v540 = vrcp.pop %v442
    %v541 = vmul.f32 %v442, %v540
    %v542 = vsub.f32 1.0, %v541
    %v543 = vmul.f32 %v540, %v542
    %v544 = vadd.f32 %v540, %v543
    %vm545 = vweird.f32 %v442
    %vm546 = vweird.f32 %v540
    %vm547 = vmor %vm545, %vm546
    %v548 = vsel %vm547, %v540, %v544
    %v549 = vand.u32 2147483647, %v442
    %vm550 = vcmp.eq.f32.partialorder %v549, 8.507059e+37
    %v551 = vand.u32 %v442, 2147483648
    %v552 = vor.u32 1.1754944e-38, %v551
    %v553 = vsel %vm550, %v552, %v548
    %v554 = vmul.f32 %v391, %v553
    %v555 = vrcp.pop %v449
    %v556 = vmul.f32 %v449, %v555
    %v557 = vsub.f32 1.0, %v556
    %v558 = vmul.f32 %v555, %v557
    %v559 = vadd.f32 %v555, %v558
    %vm560 = vweird.f32 %v449
    %vm561 = vweird.f32 %v555
    %vm562 = vmor %vm560, %vm561
    %v563 = vsel %vm562, %v555, %v559
    %v564 = vand.u32 2147483647, %v449
    %vm565 = vcmp.eq.f32.partialorder %v564, 8.507059e+37
    %v566 = vand.u32 %v449, 2147483648
    %v567 = vor.u32 1.1754944e-38, %v566
    %v568 = vsel %vm565, %v567, %v563
    %v569 = vmul.f32 %v393, %v568
    %v570 = vld [vmem:[%s5] sm:$0xf]
    %579 = vrot.lane.b32.xlu0 %v464, 92
    %v580 = vpop.permute.xlu0 %579
    %581 = vrot.lane.b32.xlu0 %v479, 92
    %v582 = vpop.permute.xlu0 %581
    %583 = vrot.lane.b32.xlu0 %v494, 92
    %v584 = vpop.permute.xlu0 %583
    %585 = vrot.lane.b32.xlu0 %v509, 92
    %v586 = vpop.permute.xlu0 %585
    %587 = vrot.lane.b32.xlu0 %v524, 92
    %v588 = vpop.permute.xlu0 %587
    %589 = vrot.lane.b32.xlu0 %v539, 92
    %v590 = vpop.permute.xlu0 %589
    %591 = vrot.lane.b32.xlu0 %v554, 92
    %v592 = vpop.permute.xlu0 %591
    %593 = vrot.lane.b32.xlu0 %v569, 92
    %v594 = vpop.permute.xlu0 %593
    %vm595 = vcmask 31744
    %v596 = vsel %vm595, %v580, 0
    %v598 = vsel %vm595, %v582, 0
    %v600 = vsel %vm595, %v584, 0
    %v602 = vsel %vm595, %v586, 0
    %v604 = vsel %vm595, %v588, 0
    %v606 = vsel %vm595, %v590, 0
    %v608 = vsel %vm595, %v592, 0
    %v610 = vsel %vm595, %v594, 0
    %vm612 = vcmask 1043456
    %v614 = vsel %vm612, %v570, 0
    %616 = vmatpush.msra.mxu0 0.0
    %617 = vmatpush.msra.mxu0 0.0
    %618 = vmatpush.msra.mxu0 0.0
    %619 = vmatpush.msra.mxu0 0.0
    %620 = vmatpush.msra.mxu0 0.0
    %621 = vmatpush.msra.mxu0 0.0
    %622 = vmatpush.msra.mxu0 0.0
    %623 = vmatpush.msra.mxu0 0.0
    %624 = vmatpush.msra.mxu0 0.0
    %625 = vmatpush.msra.mxu0 0.0
    %626 = vmatpush.msra.mxu0 0.0
    %627 = vmatpush.msra.mxu0 0.0
    %628 = vmatpush.msra.mxu0 0.0
    %629 = vmatpush.msra.mxu0 0.0
    %630 = vmatpush.msra.mxu0 0.0
    %631 = vmatpush.msra.mxu0 %v614
    %632 = vmatmul.f32.gmra.mxu0 %v596
    %v633 = vpop.f32.mrf.mxu0
    %v634 = vadd.f32 0.0, %v633
    %635 = vmatmul.f32.gmra.mxu0 %v598
    %v636 = vpop.f32.mrf.mxu0
    %v637 = vadd.f32 0.0, %v636
    %638 = vmatmul.f32.gmra.mxu0 %v600
    %v639 = vpop.f32.mrf.mxu0
    %v640 = vadd.f32 0.0, %v639
    %641 = vmatmul.f32.gmra.mxu0 %v602
    %v642 = vpop.f32.mrf.mxu0
    %v643 = vadd.f32 0.0, %v642
    %644 = vmatmul.f32.gmra.mxu0 %v604
    %v645 = vpop.f32.mrf.mxu0
    %v646 = vadd.f32 0.0, %v645
    %647 = vmatmul.f32.gmra.mxu0 %v606
    %v648 = vpop.f32.mrf.mxu0
    %v649 = vadd.f32 0.0, %v648
    %650 = vmatmul.f32.gmra.mxu0 %v608
    %v651 = vpop.f32.mrf.mxu0
    %v652 = vadd.f32 0.0, %v651
    %653 = vmatmul.f32.gmra.mxu0 %v610
    %v654 = vpop.f32.mrf.mxu0
    %v655 = vadd.f32 0.0, %v654
    %656 = vdwg.mxu0
    %v657 = vadd.f32 %v157, %v204
    %v658 = vadd.f32 %v160, %v204
    %v659 = vadd.f32 %v163, %v204
    %v660 = vadd.f32 %v166, %v204
    %v661 = vadd.f32 %v169, %v204
    %v662 = vadd.f32 %v172, %v204
    %v663 = vadd.f32 %v175, %v204
    %v664 = vadd.f32 %v178, %v204
    %v665 = vmul.f32 %v634, %v657
    %v666 = vmul.f32 %v637, %v658
    %v667 = vmul.f32 %v640, %v659
    %v668 = vmul.f32 %v643, %v660
    %v669 = vmul.f32 %v646, %v661
    %v670 = vmul.f32 %v649, %v662
    %v671 = vmul.f32 %v652, %v663
    %v672 = vmul.f32 %v655, %v664
    %vm673 = vcmask 261120
    %v674 = vsel %vm673, %v665, 0.0
    %v675 = vrot.slane %v674, 4
    %v676 = vadd.f32 %v674, %v675
    %v677 = vrot.slane %v676, 2
    %v678 = vadd.f32 %v676, %v677
    %v679 = vrot.slane %v678, 1
    %v680 = vadd.f32 %v678, %v679
    %v681 = vsel %vm673, %v666, 0.0
    %v682 = vrot.slane %v681, 4
    %v683 = vadd.f32 %v681, %v682
    %v684 = vrot.slane %v683, 2
    %v685 = vadd.f32 %v683, %v684
    %v686 = vrot.slane %v685, 1
    %v687 = vadd.f32 %v685, %v686
    %v688 = vsel %vm673, %v667, 0.0
    %v689 = vrot.slane %v688, 4
    %v690 = vadd.f32 %v688, %v689
    %v691 = vrot.slane %v690, 2
    %v692 = vadd.f32 %v690, %v691
    %v693 = vrot.slane %v692, 1
    %v694 = vadd.f32 %v692, %v693
    %v695 = vsel %vm673, %v668, 0.0
    %v696 = vrot.slane %v695, 4
    %v697 = vadd.f32 %v695, %v696
    %v698 = vrot.slane %v697, 2
    %v699 = vadd.f32 %v697, %v698
    %v700 = vrot.slane %v699, 1
    %v701 = vadd.f32 %v699, %v700
    %v702 = vsel %vm673, %v669, 0.0
    %v703 = vrot.slane %v702, 4
    %v704 = vadd.f32 %v702, %v703
    %v705 = vrot.slane %v704, 2
    %v706 = vadd.f32 %v704, %v705
    %v707 = vrot.slane %v706, 1
    %v708 = vadd.f32 %v706, %v707
    %v709 = vsel %vm673, %v670, 0.0
    %v710 = vrot.slane %v709, 4
    %v711 = vadd.f32 %v709, %v710
    %v712 = vrot.slane %v711, 2
    %v713 = vadd.f32 %v711, %v712
    %v714 = vrot.slane %v713, 1
    %v715 = vadd.f32 %v713, %v714
    %v716 = vsel %vm673, %v671, 0.0
    %v717 = vrot.slane %v716, 4
    %v718 = vadd.f32 %v716, %v717
    %v719 = vrot.slane %v718, 2
    %v720 = vadd.f32 %v718, %v719
    %v721 = vrot.slane %v720, 1
    %v722 = vadd.f32 %v720, %v721
    %v723 = vsel %vm673, %v672, 0.0
    %v724 = vrot.slane %v723, 4
    %v725 = vadd.f32 %v723, %v724
    %v726 = vrot.slane %v725, 2
    %v727 = vadd.f32 %v725, %v726
    %v728 = vrot.slane %v727, 1
    %v729 = vadd.f32 %v727, %v728
    %v730 = vld [vmem:[%s6] sm:$0x1]
    %v732 = vperm.slane %v730, 0
    %v734 = vadd.f32 %v680, %v732
    %v735 = vadd.f32 %v687, %v732
    %v736 = vadd.f32 %v694, %v732
    %v737 = vadd.f32 %v701, %v732
    %v738 = vadd.f32 %v708, %v732
    %v739 = vadd.f32 %v715, %v732
    %v740 = vadd.f32 %v722, %v732
    %v741 = vadd.f32 %v729, %v732
    %v742 = vmul.f32 %v734, 1.442695
    %v743 = vpow.pop %v742
    %v744 = vmul.f32 %v735, 1.442695
    %v745 = vpow.pop %v744
    %v746 = vmul.f32 %v736, 1.442695
    %v747 = vpow.pop %v746
    %v748 = vmul.f32 %v737, 1.442695
    %v749 = vpow.pop %v748
    %v750 = vmul.f32 %v738, 1.442695
    %v751 = vpow.pop %v750
    %v752 = vmul.f32 %v739, 1.442695
    %v753 = vpow.pop %v752
    %v754 = vmul.f32 %v740, 1.442695
    %v755 = vpow.pop %v754
    %v756 = vmul.f32 %v741, 1.442695
    %v757 = vpow.pop %v756
    %v758 = vsub.f32 %v743, 1.0
    %v759 = vsub.f32 %v745, 1.0
    %v760 = vsub.f32 %v747, 1.0
    %v761 = vsub.f32 %v749, 1.0
    %v762 = vsub.f32 %v751, 1.0
    %v763 = vsub.f32 %v753, 1.0
    %v764 = vsub.f32 %v755, 1.0
    %v765 = vsub.f32 %v757, 1.0
    %v766 = vand.u32 2147483647, %v734
    %v767 = vand.u32 2147483647, %v735
    %v768 = vand.u32 2147483647, %v736
    %v769 = vand.u32 2147483647, %v737
    %v770 = vand.u32 2147483647, %v738
    %v771 = vand.u32 2147483647, %v739
    %v772 = vand.u32 2147483647, %v740
    %v773 = vand.u32 2147483647, %v741
    %vm774 = vcmp.lt.f32.partialorder %v766, 0.001
    %vm775 = vcmp.lt.f32.partialorder %v767, 0.001
    %vm776 = vcmp.lt.f32.partialorder %v768, 0.001
    %vm777 = vcmp.lt.f32.partialorder %v769, 0.001
    %vm778 = vcmp.lt.f32.partialorder %v770, 0.001
    %vm779 = vcmp.lt.f32.partialorder %v771, 0.001
    %vm780 = vcmp.lt.f32.partialorder %v772, 0.001
    %vm781 = vcmp.lt.f32.partialorder %v773, 0.001
    %v782 = vmul.f32 %v734, 0.5
    %v783 = vmul.f32 %v735, 0.5
    %v784 = vmul.f32 %v736, 0.5
    %v785 = vmul.f32 %v737, 0.5
    %v786 = vmul.f32 %v738, 0.5
    %v787 = vmul.f32 %v739, 0.5
    %v788 = vmul.f32 %v740, 0.5
    %v789 = vmul.f32 %v741, 0.5
    %v790 = vmul.f32 %v782, %v734
    %v791 = vmul.f32 %v783, %v735
    %v792 = vmul.f32 %v784, %v736
    %v793 = vmul.f32 %v785, %v737
    %v794 = vmul.f32 %v786, %v738
    %v795 = vmul.f32 %v787, %v739
    %v796 = vmul.f32 %v788, %v740
    %v797 = vmul.f32 %v789, %v741
    %v798 = vadd.f32 %v734, %v790
    %v799 = vadd.f32 %v735, %v791
    %v800 = vadd.f32 %v736, %v792
    %v801 = vadd.f32 %v737, %v793
    %v802 = vadd.f32 %v738, %v794
    %v803 = vadd.f32 %v739, %v795
    %v804 = vadd.f32 %v740, %v796
    %v805 = vadd.f32 %v741, %v797
    %v806 = vsel %vm774, %v798, %v758
    %v807 = vsel %vm775, %v799, %v759
    %v808 = vsel %vm776, %v800, %v760
    %v809 = vsel %vm777, %v801, %v761
    %v810 = vsel %vm778, %v802, %v762
    %v811 = vsel %vm779, %v803, %v763
    %v812 = vsel %vm780, %v804, %v764
    %v813 = vsel %vm781, %v805, %v765
    %vm814 = vcmp.gt.f32.partialorder %v734, 0.0
    %vm815 = vcmp.gt.f32.partialorder %v735, 0.0
    %vm816 = vcmp.gt.f32.partialorder %v736, 0.0
    %vm817 = vcmp.gt.f32.partialorder %v737, 0.0
    %vm818 = vcmp.gt.f32.partialorder %v738, 0.0
    %vm819 = vcmp.gt.f32.partialorder %v739, 0.0
    %vm820 = vcmp.gt.f32.partialorder %v740, 0.0
    %vm821 = vcmp.gt.f32.partialorder %v741, 0.0
    %v822 = vsel %vm814, %v734, %v806
    %v823 = vsel %vm815, %v735, %v807
    %v824 = vsel %vm816, %v736, %v808
    %v825 = vsel %vm817, %v737, %v809
    %v826 = vsel %vm818, %v738, %v810
    %v827 = vsel %vm819, %v739, %v811
    %v828 = vsel %vm820, %v740, %v812
    %v829 = vsel %vm821, %v741, %v813
    %v830 = vld [vmem:[%s7] sm:$0xff]
    %v831 = vld [vmem:[%s7 + $0x8] sm:$0xff]
    %v832 = vld [vmem:[%s7 + $0x10] sm:$0xff]
    %v833 = vld [vmem:[%s7 + $0x18] sm:$0xff]
    %v842 = vrot.slane %v823, 7
    %vm843 = vcmask 1041409
    %v844 = vsel %vm843, %v842, %v822
    %v845 = vrot.slane %v824, 6
    %vm846 = vcmask 1042434
    %v847 = vsel %vm846, %v845, %v844
    %v848 = vrot.slane %v825, 5
    %vm849 = vcmask 1043459
    %v850 = vsel %vm849, %v848, %v847
    %v851 = vrot.slane %v826, 4
    %vm852 = vcmask 1044484
    %v853 = vsel %vm852, %v851, %v850
    %v854 = vrot.slane %v827, 3
    %vm855 = vcmask 1045509
    %v856 = vsel %vm855, %v854, %v853
    %v857 = vrot.slane %v828, 2
    %vm858 = vcmask 1046534
    %v859 = vsel %vm858, %v857, %v856
    %v860 = vrot.slane %v829, 1
    %vm861 = vcmask 1047559
    %v862 = vsel %vm861, %v860, %v859
    %v863 = vsel %vm673, %v862, 0
    %865 = vmatpush.msra.mxu0 0.0
    %866 = vmatpush.msra.mxu0 0.0
    %867 = vmatpush.msra.mxu0 0.0
    %868 = vmatpush.msra.mxu0 0.0
    %869 = vmatpush.msra.mxu0 0.0
    %870 = vmatpush.msra.mxu0 0.0
    %871 = vmatpush.msra.mxu0 0.0
    %872 = vmatpush.msra.mxu0 0.0
    %873 = vmatpush.msra.mxu0 0.0
    %874 = vmatpush.msra.mxu0 0.0
    %875 = vmatpush.msra.mxu0 0.0
    %876 = vmatpush.msra.mxu0 0.0
    %877 = vmatpush.msra.mxu0 %v833
    %878 = vmatpush.msra.mxu0 %v832
    %879 = vmatpush.msra.mxu0 %v831
    %880 = vmatpush.msra.mxu0 %v830
    %881 = vmatmul.f32.gmra.mxu0 %v863
    %v882 = vpop.f32.mrf.mxu0
    %v883 = vadd.f32 0.0, %v882
    %884 = vdwg.mxu0
    %v886 = vrot.slane %v883, 1
    %v887 = vrot.slane %v883, 2
    %v888 = vrot.slane %v883, 3
    %v889 = vrot.slane %v883, 4
    %v890 = vrot.slane %v883, 5
    %v891 = vrot.slane %v883, 6
    %v892 = vrot.slane %v883, 7
    %v893 = vperm.slane %v883, 0
    %v894 = vperm.slane %v886, 0
    %v895 = vperm.slane %v887, 0
    %v896 = vperm.slane %v888, 0
    %v897 = vperm.slane %v889, 0
    %v898 = vperm.slane %v890, 0
    %v899 = vperm.slane %v891, 0
    %v900 = vperm.slane %v892, 0
    %909 = vrot.lane.b32.xlu0 %v883, 4
    %v910 = vpop.permute.xlu0 %909
    %v912 = vadd.f32 %v893, %v910
    %v913 = vadd.f32 %v894, %v910
    %v914 = vadd.f32 %v895, %v910
    %v915 = vadd.f32 %v896, %v910
    %v916 = vadd.f32 %v897, %v910
    %v917 = vadd.f32 %v898, %v910
    %v918 = vadd.f32 %v899, %v910
    %v919 = vadd.f32 %v900, %v910
    %920 = vrot.lane.b32.xlu0 %v157, 96
    %v921 = vpop.permute.xlu0 %920
    %922 = vrot.lane.b32.xlu0 %v160, 96
    %v923 = vpop.permute.xlu0 %922
    %924 = vrot.lane.b32.xlu0 %v163, 96
    %v925 = vpop.permute.xlu0 %924
    %926 = vrot.lane.b32.xlu0 %v166, 96
    %v927 = vpop.permute.xlu0 %926
    %928 = vrot.lane.b32.xlu0 %v169, 96
    %v929 = vpop.permute.xlu0 %928
    %930 = vrot.lane.b32.xlu0 %v172, 96
    %v931 = vpop.permute.xlu0 %930
    %932 = vrot.lane.b32.xlu0 %v175, 96
    %v933 = vpop.permute.xlu0 %932
    %934 = vrot.lane.b32.xlu0 %v178, 96
    %v935 = vpop.permute.xlu0 %934
    %v944 = vadd.f32 %v912, %v921
    %v945 = vadd.f32 %v913, %v923
    %v946 = vadd.f32 %v914, %v925
    %v947 = vadd.f32 %v915, %v927
    %v948 = vadd.f32 %v916, %v929
    %v949 = vadd.f32 %v917, %v931
    %v950 = vadd.f32 %v918, %v933
    %v951 = vadd.f32 %v919, %v935
    %vm952 = vcmp.gt.f32.partialorder %v944, 0.0
    %vm953 = vcmp.gt.f32.partialorder %v945, 0.0
    %vm954 = vcmp.gt.f32.partialorder %v946, 0.0
    %vm955 = vcmp.gt.f32.partialorder %v947, 0.0
    %vm956 = vcmp.gt.f32.partialorder %v948, 0.0
    %vm957 = vcmp.gt.f32.partialorder %v949, 0.0
    %vm958 = vcmp.gt.f32.partialorder %v950, 0.0
    %vm959 = vcmp.gt.f32.partialorder %v951, 0.0
    %v960 = vmul.f32 %v944, 0.2
    %v961 = vmul.f32 %v945, 0.2
    %v962 = vmul.f32 %v946, 0.2
    %v963 = vmul.f32 %v947, 0.2
    %v964 = vmul.f32 %v948, 0.2
    %v965 = vmul.f32 %v949, 0.2
    %v966 = vmul.f32 %v950, 0.2
    %v967 = vmul.f32 %v951, 0.2
    %v968 = vsel %vm952, %v944, %v960
    %v969 = vsel %vm953, %v945, %v961
    %v970 = vsel %vm954, %v946, %v962
    %v971 = vsel %vm955, %v947, %v963
    %v972 = vsel %vm956, %v948, %v964
    %v973 = vsel %vm957, %v949, %v965
    %v974 = vsel %vm958, %v950, %v966
    %v975 = vsel %vm959, %v951, %v967
    %v976 = vadd.f32 %v968, %v63
    %v977 = vadd.f32 %v969, %v70
    %v978 = vadd.f32 %v970, %v77
    %v979 = vadd.f32 %v971, %v84
    %v980 = vadd.f32 %v972, %v91
    %v981 = vadd.f32 %v973, %v98
    %v982 = vadd.f32 %v974, %v105
    %v983 = vadd.f32 %v975, %v112
    %v984 = vsel %vm313, %v976, -inf
    %v985 = vrot.slane %v984, 4
    %v986 = vmax.f32 %v984, %v985
    %v987 = vrot.slane %v986, 2
    %v988 = vmax.f32 %v986, %v987
    %v989 = vrot.slane %v988, 1
    %v990 = vmax.f32 %v988, %v989
    %v991 = vsel %vm313, %v977, -inf
    %v992 = vrot.slane %v991, 4
    %v993 = vmax.f32 %v991, %v992
    %v994 = vrot.slane %v993, 2
    %v995 = vmax.f32 %v993, %v994
    %v996 = vrot.slane %v995, 1
    %v997 = vmax.f32 %v995, %v996
    %v998 = vsel %vm313, %v978, -inf
    %v999 = vrot.slane %v998, 4
    %v1000 = vmax.f32 %v998, %v999
    %v1001 = vrot.slane %v1000, 2
    %v1002 = vmax.f32 %v1000, %v1001
    %v1003 = vrot.slane %v1002, 1
    %v1004 = vmax.f32 %v1002, %v1003
    %v1005 = vsel %vm313, %v979, -inf
    %v1006 = vrot.slane %v1005, 4
    %v1007 = vmax.f32 %v1005, %v1006
    %v1008 = vrot.slane %v1007, 2
    %v1009 = vmax.f32 %v1007, %v1008
    %v1010 = vrot.slane %v1009, 1
    %v1011 = vmax.f32 %v1009, %v1010
    %v1012 = vsel %vm313, %v980, -inf
    %v1013 = vrot.slane %v1012, 4
    %v1014 = vmax.f32 %v1012, %v1013
    %v1015 = vrot.slane %v1014, 2
    %v1016 = vmax.f32 %v1014, %v1015
    %v1017 = vrot.slane %v1016, 1
    %v1018 = vmax.f32 %v1016, %v1017
    %v1019 = vsel %vm313, %v981, -inf
    %v1020 = vrot.slane %v1019, 4
    %v1021 = vmax.f32 %v1019, %v1020
    %v1022 = vrot.slane %v1021, 2
    %v1023 = vmax.f32 %v1021, %v1022
    %v1024 = vrot.slane %v1023, 1
    %v1025 = vmax.f32 %v1023, %v1024
    %v1026 = vsel %vm313, %v982, -inf
    %v1027 = vrot.slane %v1026, 4
    %v1028 = vmax.f32 %v1026, %v1027
    %v1029 = vrot.slane %v1028, 2
    %v1030 = vmax.f32 %v1028, %v1029
    %v1031 = vrot.slane %v1030, 1
    %v1032 = vmax.f32 %v1030, %v1031
    %v1033 = vsel %vm313, %v983, -inf
    %v1034 = vrot.slane %v1033, 4
    %v1035 = vmax.f32 %v1033, %v1034
    %v1036 = vrot.slane %v1035, 2
    %v1037 = vmax.f32 %v1035, %v1036
    %v1038 = vrot.slane %v1037, 1
    %v1039 = vmax.f32 %v1037, %v1038
    %v1040 = vsub.f32 %v976, %v990
    %v1041 = vsub.f32 %v977, %v997
    %v1042 = vsub.f32 %v978, %v1004
    %v1043 = vsub.f32 %v979, %v1011
    %v1044 = vsub.f32 %v980, %v1018
    %v1045 = vsub.f32 %v981, %v1025
    %v1046 = vsub.f32 %v982, %v1032
    %v1047 = vsub.f32 %v983, %v1039
    %v1048 = vmul.f32 %v1040, 1.442695
    %v1049 = vpow.pop %v1048
    %v1050 = vmul.f32 %v1041, 1.442695
    %v1051 = vpow.pop %v1050
    %v1052 = vmul.f32 %v1042, 1.442695
    %v1053 = vpow.pop %v1052
    %v1054 = vmul.f32 %v1043, 1.442695
    %v1055 = vpow.pop %v1054
    %v1056 = vmul.f32 %v1044, 1.442695
    %v1057 = vpow.pop %v1056
    %v1058 = vmul.f32 %v1045, 1.442695
    %v1059 = vpow.pop %v1058
    %v1060 = vmul.f32 %v1046, 1.442695
    %v1061 = vpow.pop %v1060
    %v1062 = vmul.f32 %v1047, 1.442695
    %v1063 = vpow.pop %v1062
    %v1064 = vsel %vm313, %v1049, 0.0
    %v1065 = vrot.slane %v1064, 4
    %v1066 = vadd.f32 %v1064, %v1065
    %v1067 = vrot.slane %v1066, 2
    %v1068 = vadd.f32 %v1066, %v1067
    %v1069 = vrot.slane %v1068, 1
    %v1070 = vadd.f32 %v1068, %v1069
    %v1071 = vsel %vm313, %v1051, 0.0
    %v1072 = vrot.slane %v1071, 4
    %v1073 = vadd.f32 %v1071, %v1072
    %v1074 = vrot.slane %v1073, 2
    %v1075 = vadd.f32 %v1073, %v1074
    %v1076 = vrot.slane %v1075, 1
    %v1077 = vadd.f32 %v1075, %v1076
    %v1078 = vsel %vm313, %v1053, 0.0
    %v1079 = vrot.slane %v1078, 4
    %v1080 = vadd.f32 %v1078, %v1079
    %v1081 = vrot.slane %v1080, 2
    %v1082 = vadd.f32 %v1080, %v1081
    %v1083 = vrot.slane %v1082, 1
    %v1084 = vadd.f32 %v1082, %v1083
    %v1085 = vsel %vm313, %v1055, 0.0
    %v1086 = vrot.slane %v1085, 4
    %v1087 = vadd.f32 %v1085, %v1086
    %v1088 = vrot.slane %v1087, 2
    %v1089 = vadd.f32 %v1087, %v1088
    %v1090 = vrot.slane %v1089, 1
    %v1091 = vadd.f32 %v1089, %v1090
    %v1092 = vsel %vm313, %v1057, 0.0
    %v1093 = vrot.slane %v1092, 4
    %v1094 = vadd.f32 %v1092, %v1093
    %v1095 = vrot.slane %v1094, 2
    %v1096 = vadd.f32 %v1094, %v1095
    %v1097 = vrot.slane %v1096, 1
    %v1098 = vadd.f32 %v1096, %v1097
    %v1099 = vsel %vm313, %v1059, 0.0
    %v1100 = vrot.slane %v1099, 4
    %v1101 = vadd.f32 %v1099, %v1100
    %v1102 = vrot.slane %v1101, 2
    %v1103 = vadd.f32 %v1101, %v1102
    %v1104 = vrot.slane %v1103, 1
    %v1105 = vadd.f32 %v1103, %v1104
    %v1106 = vsel %vm313, %v1061, 0.0
    %v1107 = vrot.slane %v1106, 4
    %v1108 = vadd.f32 %v1106, %v1107
    %v1109 = vrot.slane %v1108, 2
    %v1110 = vadd.f32 %v1108, %v1109
    %v1111 = vrot.slane %v1110, 1
    %v1112 = vadd.f32 %v1110, %v1111
    %v1113 = vsel %vm313, %v1063, 0.0
    %v1114 = vrot.slane %v1113, 4
    %v1115 = vadd.f32 %v1113, %v1114
    %v1116 = vrot.slane %v1115, 2
    %v1117 = vadd.f32 %v1115, %v1116
    %v1118 = vrot.slane %v1117, 1
    %v1119 = vadd.f32 %v1117, %v1118
    %v1120 = vrcp.pop %v1070
    %v1121 = vmul.f32 %v1070, %v1120
    %v1122 = vsub.f32 1.0, %v1121
    %v1123 = vmul.f32 %v1120, %v1122
    %v1124 = vadd.f32 %v1120, %v1123
    %vm1125 = vweird.f32 %v1070
    %vm1126 = vweird.f32 %v1120
    %vm1127 = vmor %vm1125, %vm1126
    %v1128 = vsel %vm1127, %v1120, %v1124
    %v1129 = vand.u32 2147483647, %v1070
    %vm1130 = vcmp.eq.f32.partialorder %v1129, 8.507059e+37
    %v1131 = vand.u32 %v1070, 2147483648
    %v1132 = vor.u32 1.1754944e-38, %v1131
    %v1133 = vsel %vm1130, %v1132, %v1128
    %v1134 = vmul.f32 %v1049, %v1133
    %v1135 = vrcp.pop %v1077
    %v1136 = vmul.f32 %v1077, %v1135
    %v1137 = vsub.f32 1.0, %v1136
    %v1138 = vmul.f32 %v1135, %v1137
    %v1139 = vadd.f32 %v1135, %v1138
    %vm1140 = vweird.f32 %v1077
    %vm1141 = vweird.f32 %v1135
    %vm1142 = vmor %vm1140, %vm1141
    %v1143 = vsel %vm1142, %v1135, %v1139
    %v1144 = vand.u32 2147483647, %v1077
    %vm1145 = vcmp.eq.f32.partialorder %v1144, 8.507059e+37
    %v1146 = vand.u32 %v1077, 2147483648
    %v1147 = vor.u32 1.1754944e-38, %v1146
    %v1148 = vsel %vm1145, %v1147, %v1143
    %v1149 = vmul.f32 %v1051, %v1148
    %v1150 = vrcp.pop %v1084
    %v1151 = vmul.f32 %v1084, %v1150
    %v1152 = vsub.f32 1.0, %v1151
    %v1153 = vmul.f32 %v1150, %v1152
    %v1154 = vadd.f32 %v1150, %v1153
    %vm1155 = vweird.f32 %v1084
    %vm1156 = vweird.f32 %v1150
    %vm1157 = vmor %vm1155, %vm1156
    %v1158 = vsel %vm1157, %v1150, %v1154
    %v1159 = vand.u32 2147483647, %v1084
    %vm1160 = vcmp.eq.f32.partialorder %v1159, 8.507059e+37
    %v1161 = vand.u32 %v1084, 2147483648
    %v1162 = vor.u32 1.1754944e-38, %v1161
    %v1163 = vsel %vm1160, %v1162, %v1158
    %v1164 = vmul.f32 %v1053, %v1163
    %v1165 = vrcp.pop %v1091
    %v1166 = vmul.f32 %v1091, %v1165
    %v1167 = vsub.f32 1.0, %v1166
    %v1168 = vmul.f32 %v1165, %v1167
    %v1169 = vadd.f32 %v1165, %v1168
    %vm1170 = vweird.f32 %v1091
    %vm1171 = vweird.f32 %v1165
    %vm1172 = vmor %vm1170, %vm1171
    %v1173 = vsel %vm1172, %v1165, %v1169
    %v1174 = vand.u32 2147483647, %v1091
    %vm1175 = vcmp.eq.f32.partialorder %v1174, 8.507059e+37
    %v1176 = vand.u32 %v1091, 2147483648
    %v1177 = vor.u32 1.1754944e-38, %v1176
    %v1178 = vsel %vm1175, %v1177, %v1173
    %v1179 = vmul.f32 %v1055, %v1178
    %v1180 = vrcp.pop %v1098
    %v1181 = vmul.f32 %v1098, %v1180
    %v1182 = vsub.f32 1.0, %v1181
    %v1183 = vmul.f32 %v1180, %v1182
    %v1184 = vadd.f32 %v1180, %v1183
    %vm1185 = vweird.f32 %v1098
    %vm1186 = vweird.f32 %v1180
    %vm1187 = vmor %vm1185, %vm1186
    %v1188 = vsel %vm1187, %v1180, %v1184
    %v1189 = vand.u32 2147483647, %v1098
    %vm1190 = vcmp.eq.f32.partialorder %v1189, 8.507059e+37
    %v1191 = vand.u32 %v1098, 2147483648
    %v1192 = vor.u32 1.1754944e-38, %v1191
    %v1193 = vsel %vm1190, %v1192, %v1188
    %v1194 = vmul.f32 %v1057, %v1193
    %v1195 = vrcp.pop %v1105
    %v1196 = vmul.f32 %v1105, %v1195
    %v1197 = vsub.f32 1.0, %v1196
    %v1198 = vmul.f32 %v1195, %v1197
    %v1199 = vadd.f32 %v1195, %v1198
    %vm1200 = vweird.f32 %v1105
    %vm1201 = vweird.f32 %v1195
    %vm1202 = vmor %vm1200, %vm1201
    %v1203 = vsel %vm1202, %v1195, %v1199
    %v1204 = vand.u32 2147483647, %v1105
    %vm1205 = vcmp.eq.f32.partialorder %v1204, 8.507059e+37
    %v1206 = vand.u32 %v1105, 2147483648
    %v1207 = vor.u32 1.1754944e-38, %v1206
    %v1208 = vsel %vm1205, %v1207, %v1203
    %v1209 = vmul.f32 %v1059, %v1208
    %v1210 = vrcp.pop %v1112
    %v1211 = vmul.f32 %v1112, %v1210
    %v1212 = vsub.f32 1.0, %v1211
    %v1213 = vmul.f32 %v1210, %v1212
    %v1214 = vadd.f32 %v1210, %v1213
    %vm1215 = vweird.f32 %v1112
    %vm1216 = vweird.f32 %v1210
    %vm1217 = vmor %vm1215, %vm1216
    %v1218 = vsel %vm1217, %v1210, %v1214
    %v1219 = vand.u32 2147483647, %v1112
    %vm1220 = vcmp.eq.f32.partialorder %v1219, 8.507059e+37
    %v1221 = vand.u32 %v1112, 2147483648
    %v1222 = vor.u32 1.1754944e-38, %v1221
    %v1223 = vsel %vm1220, %v1222, %v1218
    %v1224 = vmul.f32 %v1061, %v1223
    %v1225 = vrcp.pop %v1119
    %v1226 = vmul.f32 %v1119, %v1225
    %v1227 = vsub.f32 1.0, %v1226
    %v1228 = vmul.f32 %v1225, %v1227
    %v1229 = vadd.f32 %v1225, %v1228
    %vm1230 = vweird.f32 %v1119
    %vm1231 = vweird.f32 %v1225
    %vm1232 = vmor %vm1230, %vm1231
    %v1233 = vsel %vm1232, %v1225, %v1229
    %v1234 = vand.u32 2147483647, %v1119
    %vm1235 = vcmp.eq.f32.partialorder %v1234, 8.507059e+37
    %v1236 = vand.u32 %v1119, 2147483648
    %v1237 = vor.u32 1.1754944e-38, %v1236
    %v1238 = vsel %vm1235, %v1237, %v1233
    %v1239 = vmul.f32 %v1063, %v1238
    %v1240 = vld [vmem:[%s8] sm:$0xf]
    %1249 = vrot.lane.b32.xlu0 %v1134, 92
    %v1250 = vpop.permute.xlu0 %1249
    %1251 = vrot.lane.b32.xlu0 %v1149, 92
    %v1252 = vpop.permute.xlu0 %1251
    %1253 = vrot.lane.b32.xlu0 %v1164, 92
    %v1254 = vpop.permute.xlu0 %1253
    %1255 = vrot.lane.b32.xlu0 %v1179, 92
    %v1256 = vpop.permute.xlu0 %1255
    %1257 = vrot.lane.b32.xlu0 %v1194, 92
    %v1258 = vpop.permute.xlu0 %1257
    %1259 = vrot.lane.b32.xlu0 %v1209, 92
    %v1260 = vpop.permute.xlu0 %1259
    %1261 = vrot.lane.b32.xlu0 %v1224, 92
    %v1262 = vpop.permute.xlu0 %1261
    %1263 = vrot.lane.b32.xlu0 %v1239, 92
    %v1264 = vpop.permute.xlu0 %1263
    %v1265 = vsel %vm595, %v1250, 0
    %v1267 = vsel %vm595, %v1252, 0
    %v1269 = vsel %vm595, %v1254, 0
    %v1271 = vsel %vm595, %v1256, 0
    %v1273 = vsel %vm595, %v1258, 0
    %v1275 = vsel %vm595, %v1260, 0
    %v1277 = vsel %vm595, %v1262, 0
    %v1279 = vsel %vm595, %v1264, 0
    %v1282 = vsel %vm612, %v1240, 0
    %1284 = vmatpush.msra.mxu0 0.0
    %1285 = vmatpush.msra.mxu0 0.0
    %1286 = vmatpush.msra.mxu0 0.0
    %1287 = vmatpush.msra.mxu0 0.0
    %1288 = vmatpush.msra.mxu0 0.0
    %1289 = vmatpush.msra.mxu0 0.0
    %1290 = vmatpush.msra.mxu0 0.0
    %1291 = vmatpush.msra.mxu0 0.0
    %1292 = vmatpush.msra.mxu0 0.0
    %1293 = vmatpush.msra.mxu0 0.0
    %1294 = vmatpush.msra.mxu0 0.0
    %1295 = vmatpush.msra.mxu0 0.0
    %1296 = vmatpush.msra.mxu0 0.0
    %1297 = vmatpush.msra.mxu0 0.0
    %1298 = vmatpush.msra.mxu0 0.0
    %1299 = vmatpush.msra.mxu0 %v1282
    %1300 = vmatmul.f32.gmra.mxu0 %v1265
    %v1301 = vpop.f32.mrf.mxu0
    %v1302 = vadd.f32 0.0, %v1301
    %1303 = vmatmul.f32.gmra.mxu0 %v1267
    %v1304 = vpop.f32.mrf.mxu0
    %v1305 = vadd.f32 0.0, %v1304
    %1306 = vmatmul.f32.gmra.mxu0 %v1269
    %v1307 = vpop.f32.mrf.mxu0
    %v1308 = vadd.f32 0.0, %v1307
    %1309 = vmatmul.f32.gmra.mxu0 %v1271
    %v1310 = vpop.f32.mrf.mxu0
    %v1311 = vadd.f32 0.0, %v1310
    %1312 = vmatmul.f32.gmra.mxu0 %v1273
    %v1313 = vpop.f32.mrf.mxu0
    %v1314 = vadd.f32 0.0, %v1313
    %1315 = vmatmul.f32.gmra.mxu0 %v1275
    %v1316 = vpop.f32.mrf.mxu0
    %v1317 = vadd.f32 0.0, %v1316
    %1318 = vmatmul.f32.gmra.mxu0 %v1277
    %v1319 = vpop.f32.mrf.mxu0
    %v1320 = vadd.f32 0.0, %v1319
    %1321 = vmatmul.f32.gmra.mxu0 %v1279
    %v1322 = vpop.f32.mrf.mxu0
    %v1323 = vadd.f32 0.0, %v1322
    %1324 = vdwg.mxu0
    %1325 = vrot.lane.b32.xlu0 %v883, 36
    %v1326 = vpop.permute.xlu0 %1325
    %v1328 = vadd.f32 %v157, %v1326
    %v1329 = vadd.f32 %v160, %v1326
    %v1330 = vadd.f32 %v163, %v1326
    %v1331 = vadd.f32 %v166, %v1326
    %v1332 = vadd.f32 %v169, %v1326
    %v1333 = vadd.f32 %v172, %v1326
    %v1334 = vadd.f32 %v175, %v1326
    %v1335 = vadd.f32 %v178, %v1326
    %1344 = vrot.lane.b32.xlu0 %v1328, 92
    %v1345 = vpop.permute.xlu0 %1344
    %1346 = vrot.lane.b32.xlu0 %v1329, 92
    %v1347 = vpop.permute.xlu0 %1346
    %1348 = vrot.lane.b32.xlu0 %v1330, 92
    %v1349 = vpop.permute.xlu0 %1348
    %1350 = vrot.lane.b32.xlu0 %v1331, 92
    %v1351 = vpop.permute.xlu0 %1350
    %1352 = vrot.lane.b32.xlu0 %v1332, 92
    %v1353 = vpop.permute.xlu0 %1352
    %1354 = vrot.lane.b32.xlu0 %v1333, 92
    %v1355 = vpop.permute.xlu0 %1354
    %1356 = vrot.lane.b32.xlu0 %v1334, 92
    %v1357 = vpop.permute.xlu0 %1356
    %1358 = vrot.lane.b32.xlu0 %v1335, 92
    %v1359 = vpop.permute.xlu0 %1358
    %v1368 = vmul.f32 %v1302, %v1345
    %v1369 = vmul.f32 %v1305, %v1347
    %v1370 = vmul.f32 %v1308, %v1349
    %v1371 = vmul.f32 %v1311, %v1351
    %v1372 = vmul.f32 %v1314, %v1353
    %v1373 = vmul.f32 %v1317, %v1355
    %v1374 = vmul.f32 %v1320, %v1357
    %v1375 = vmul.f32 %v1323, %v1359
    %v1376 = vsel %vm673, %v1368, 0.0
    %v1377 = vrot.slane %v1376, 4
    %v1378 = vadd.f32 %v1376, %v1377
    %v1379 = vrot.slane %v1378, 2
    %v1380 = vadd.f32 %v1378, %v1379
    %v1381 = vrot.slane %v1380, 1
    %v1382 = vadd.f32 %v1380, %v1381
    %v1383 = vsel %vm673, %v1369, 0.0
    %v1384 = vrot.slane %v1383, 4
    %v1385 = vadd.f32 %v1383, %v1384
    %v1386 = vrot.slane %v1385, 2
    %v1387 = vadd.f32 %v1385, %v1386
    %v1388 = vrot.slane %v1387, 1
    %v1389 = vadd.f32 %v1387, %v1388
    %v1390 = vsel %vm673, %v1370, 0.0
    %v1391 = vrot.slane %v1390, 4
    %v1392 = vadd.f32 %v1390, %v1391
    %v1393 = vrot.slane %v1392, 2
    %v1394 = vadd.f32 %v1392, %v1393
    %v1395 = vrot.slane %v1394, 1
    %v1396 = vadd.f32 %v1394, %v1395
    %v1397 = vsel %vm673, %v1371, 0.0
    %v1398 = vrot.slane %v1397, 4
    %v1399 = vadd.f32 %v1397, %v1398
    %v1400 = vrot.slane %v1399, 2
    %v1401 = vadd.f32 %v1399, %v1400
    %v1402 = vrot.slane %v1401, 1
    %v1403 = vadd.f32 %v1401, %v1402
    %v1404 = vsel %vm673, %v1372, 0.0
    %v1405 = vrot.slane %v1404, 4
    %v1406 = vadd.f32 %v1404, %v1405
    %v1407 = vrot.slane %v1406, 2
    %v1408 = vadd.f32 %v1406, %v1407
    %v1409 = vrot.slane %v1408, 1
    %v1410 = vadd.f32 %v1408, %v1409
    %v1411 = vsel %vm673, %v1373, 0.0
    %v1412 = vrot.slane %v1411, 4
    %v1413 = vadd.f32 %v1411, %v1412
    %v1414 = vrot.slane %v1413, 2
    %v1415 = vadd.f32 %v1413, %v1414
    %v1416 = vrot.slane %v1415, 1
    %v1417 = vadd.f32 %v1415, %v1416
    %v1418 = vsel %vm673, %v1374, 0.0
    %v1419 = vrot.slane %v1418, 4
    %v1420 = vadd.f32 %v1418, %v1419
    %v1421 = vrot.slane %v1420, 2
    %v1422 = vadd.f32 %v1420, %v1421
    %v1423 = vrot.slane %v1422, 1
    %v1424 = vadd.f32 %v1422, %v1423
    %v1425 = vsel %vm673, %v1375, 0.0
    %v1426 = vrot.slane %v1425, 4
    %v1427 = vadd.f32 %v1425, %v1426
    %v1428 = vrot.slane %v1427, 2
    %v1429 = vadd.f32 %v1427, %v1428
    %v1430 = vrot.slane %v1429, 1
    %v1431 = vadd.f32 %v1429, %v1430
    %v1432 = vld [vmem:[%s9] sm:$0x1]
    %v1434 = vperm.slane %v1432, 0
    %v1436 = vadd.f32 %v1382, %v1434
    %v1437 = vadd.f32 %v1389, %v1434
    %v1438 = vadd.f32 %v1396, %v1434
    %v1439 = vadd.f32 %v1403, %v1434
    %v1440 = vadd.f32 %v1410, %v1434
    %v1441 = vadd.f32 %v1417, %v1434
    %v1442 = vadd.f32 %v1424, %v1434
    %v1443 = vadd.f32 %v1431, %v1434
    %v1444 = vmul.f32 %v1436, 1.442695
    %v1445 = vpow.pop %v1444
    %v1446 = vmul.f32 %v1437, 1.442695
    %v1447 = vpow.pop %v1446
    %v1448 = vmul.f32 %v1438, 1.442695
    %v1449 = vpow.pop %v1448
    %v1450 = vmul.f32 %v1439, 1.442695
    %v1451 = vpow.pop %v1450
    %v1452 = vmul.f32 %v1440, 1.442695
    %v1453 = vpow.pop %v1452
    %v1454 = vmul.f32 %v1441, 1.442695
    %v1455 = vpow.pop %v1454
    %v1456 = vmul.f32 %v1442, 1.442695
    %v1457 = vpow.pop %v1456
    %v1458 = vmul.f32 %v1443, 1.442695
    %v1459 = vpow.pop %v1458
    %v1460 = vsub.f32 %v1445, 1.0
    %v1461 = vsub.f32 %v1447, 1.0
    %v1462 = vsub.f32 %v1449, 1.0
    %v1463 = vsub.f32 %v1451, 1.0
    %v1464 = vsub.f32 %v1453, 1.0
    %v1465 = vsub.f32 %v1455, 1.0
    %v1466 = vsub.f32 %v1457, 1.0
    %v1467 = vsub.f32 %v1459, 1.0
    %v1468 = vand.u32 2147483647, %v1436
    %v1469 = vand.u32 2147483647, %v1437
    %v1470 = vand.u32 2147483647, %v1438
    %v1471 = vand.u32 2147483647, %v1439
    %v1472 = vand.u32 2147483647, %v1440
    %v1473 = vand.u32 2147483647, %v1441
    %v1474 = vand.u32 2147483647, %v1442
    %v1475 = vand.u32 2147483647, %v1443
    %vm1476 = vcmp.lt.f32.partialorder %v1468, 0.001
    %vm1477 = vcmp.lt.f32.partialorder %v1469, 0.001
    %vm1478 = vcmp.lt.f32.partialorder %v1470, 0.001
    %vm1479 = vcmp.lt.f32.partialorder %v1471, 0.001
    %vm1480 = vcmp.lt.f32.partialorder %v1472, 0.001
    %vm1481 = vcmp.lt.f32.partialorder %v1473, 0.001
    %vm1482 = vcmp.lt.f32.partialorder %v1474, 0.001
    %vm1483 = vcmp.lt.f32.partialorder %v1475, 0.001
    %v1484 = vmul.f32 %v1436, 0.5
    %v1485 = vmul.f32 %v1437, 0.5
    %v1486 = vmul.f32 %v1438, 0.5
    %v1487 = vmul.f32 %v1439, 0.5
    %v1488 = vmul.f32 %v1440, 0.5
    %v1489 = vmul.f32 %v1441, 0.5
    %v1490 = vmul.f32 %v1442, 0.5
    %v1491 = vmul.f32 %v1443, 0.5
    %v1492 = vmul.f32 %v1484, %v1436
    %v1493 = vmul.f32 %v1485, %v1437
    %v1494 = vmul.f32 %v1486, %v1438
    %v1495 = vmul.f32 %v1487, %v1439
    %v1496 = vmul.f32 %v1488, %v1440
    %v1497 = vmul.f32 %v1489, %v1441
    %v1498 = vmul.f32 %v1490, %v1442
    %v1499 = vmul.f32 %v1491, %v1443
    %v1500 = vadd.f32 %v1436, %v1492
    %v1501 = vadd.f32 %v1437, %v1493
    %v1502 = vadd.f32 %v1438, %v1494
    %v1503 = vadd.f32 %v1439, %v1495
    %v1504 = vadd.f32 %v1440, %v1496
    %v1505 = vadd.f32 %v1441, %v1497
    %v1506 = vadd.f32 %v1442, %v1498
    %v1507 = vadd.f32 %v1443, %v1499
    %v1508 = vsel %vm1476, %v1500, %v1460
    %v1509 = vsel %vm1477, %v1501, %v1461
    %v1510 = vsel %vm1478, %v1502, %v1462
    %v1511 = vsel %vm1479, %v1503, %v1463
    %v1512 = vsel %vm1480, %v1504, %v1464
    %v1513 = vsel %vm1481, %v1505, %v1465
    %v1514 = vsel %vm1482, %v1506, %v1466
    %v1515 = vsel %vm1483, %v1507, %v1467
    %vm1516 = vcmp.gt.f32.partialorder %v1436, 0.0
    %vm1517 = vcmp.gt.f32.partialorder %v1437, 0.0
    %vm1518 = vcmp.gt.f32.partialorder %v1438, 0.0
    %vm1519 = vcmp.gt.f32.partialorder %v1439, 0.0
    %vm1520 = vcmp.gt.f32.partialorder %v1440, 0.0
    %vm1521 = vcmp.gt.f32.partialorder %v1441, 0.0
    %vm1522 = vcmp.gt.f32.partialorder %v1442, 0.0
    %vm1523 = vcmp.gt.f32.partialorder %v1443, 0.0
    %v1524 = vsel %vm1516, %v1436, %v1508
    %v1525 = vsel %vm1517, %v1437, %v1509
    %v1526 = vsel %vm1518, %v1438, %v1510
    %v1527 = vsel %vm1519, %v1439, %v1511
    %v1528 = vsel %vm1520, %v1440, %v1512
    %v1529 = vsel %vm1521, %v1441, %v1513
    %v1530 = vsel %vm1522, %v1442, %v1514
    %v1531 = vsel %vm1523, %v1443, %v1515
    %v1532 = vld [vmem:[%s10] sm:$0xff]
    %v1533 = vld [vmem:[%s10 + $0x8] sm:$0xff]
    %v1534 = vld [vmem:[%s10 + $0x10] sm:$0xff]
    %v1535 = vld [vmem:[%s10 + $0x18] sm:$0xff]
    %v1544 = vrot.slane %v1525, 7
    %v1545 = vsel %vm843, %v1544, %v1524
    %v1546 = vrot.slane %v1526, 6
    %v1547 = vsel %vm846, %v1546, %v1545
    %v1548 = vrot.slane %v1527, 5
    %v1549 = vsel %vm849, %v1548, %v1547
    %v1550 = vrot.slane %v1528, 4
    %v1551 = vsel %vm852, %v1550, %v1549
    %v1552 = vrot.slane %v1529, 3
    %v1553 = vsel %vm855, %v1552, %v1551
    %v1554 = vrot.slane %v1530, 2
    %v1555 = vsel %vm858, %v1554, %v1553
    %v1556 = vrot.slane %v1531, 1
    %v1557 = vsel %vm861, %v1556, %v1555
    %v1558 = vsel %vm673, %v1557, 0
    %1560 = vmatpush.msra.mxu0 0.0
    %1561 = vmatpush.msra.mxu0 0.0
    %1562 = vmatpush.msra.mxu0 0.0
    %1563 = vmatpush.msra.mxu0 0.0
    %1564 = vmatpush.msra.mxu0 0.0
    %1565 = vmatpush.msra.mxu0 0.0
    %1566 = vmatpush.msra.mxu0 0.0
    %1567 = vmatpush.msra.mxu0 0.0
    %1568 = vmatpush.msra.mxu0 0.0
    %1569 = vmatpush.msra.mxu0 0.0
    %1570 = vmatpush.msra.mxu0 0.0
    %1571 = vmatpush.msra.mxu0 0.0
    %1572 = vmatpush.msra.mxu0 %v1535
    %1573 = vmatpush.msra.mxu0 %v1534
    %1574 = vmatpush.msra.mxu0 %v1533
    %1575 = vmatpush.msra.mxu0 %v1532
    %1576 = vmatmul.f32.gmra.mxu0 %v1558
    %v1577 = vpop.f32.mrf.mxu0
    %v1578 = vadd.f32 0.0, %v1577
    %1579 = vdwg.mxu0
    %v1581 = vrot.slane %v1578, 1
    %v1582 = vrot.slane %v1578, 2
    %v1583 = vrot.slane %v1578, 3
    %v1584 = vrot.slane %v1578, 4
    %v1585 = vrot.slane %v1578, 5
    %v1586 = vrot.slane %v1578, 6
    %v1587 = vrot.slane %v1578, 7
    %v1588 = vperm.slane %v1578, 0
    %v1589 = vperm.slane %v1581, 0
    %v1590 = vperm.slane %v1582, 0
    %v1591 = vperm.slane %v1583, 0
    %v1592 = vperm.slane %v1584, 0
    %v1593 = vperm.slane %v1585, 0
    %v1594 = vperm.slane %v1586, 0
    %v1595 = vperm.slane %v1587, 0
    %1604 = vrot.lane.b32.xlu0 %v1578, 1
    %v1605 = vpop.permute.xlu0 %1604
    %v1607 = vadd.f32 %v1588, %v1605
    %v1608 = vadd.f32 %v1589, %v1605
    %v1609 = vadd.f32 %v1590, %v1605
    %v1610 = vadd.f32 %v1591, %v1605
    %v1611 = vadd.f32 %v1592, %v1605
    %v1612 = vadd.f32 %v1593, %v1605
    %v1613 = vadd.f32 %v1594, %v1605
    %v1614 = vadd.f32 %v1595, %v1605
    %1615 = vrot.lane.b32.xlu0 %v157, 57
    %v1616 = vpop.permute.xlu0 %1615
    %1617 = vrot.lane.b32.xlu0 %v160, 57
    %v1618 = vpop.permute.xlu0 %1617
    %1619 = vrot.lane.b32.xlu0 %v163, 57
    %v1620 = vpop.permute.xlu0 %1619
    %1621 = vrot.lane.b32.xlu0 %v166, 57
    %v1622 = vpop.permute.xlu0 %1621
    %1623 = vrot.lane.b32.xlu0 %v169, 57
    %v1624 = vpop.permute.xlu0 %1623
    %1625 = vrot.lane.b32.xlu0 %v172, 57
    %v1626 = vpop.permute.xlu0 %1625
    %1627 = vrot.lane.b32.xlu0 %v175, 57
    %v1628 = vpop.permute.xlu0 %1627
    %1629 = vrot.lane.b32.xlu0 %v178, 57
    %v1630 = vpop.permute.xlu0 %1629
    %v1639 = vadd.f32 %v1607, %v1616
    %v1640 = vadd.f32 %v1608, %v1618
    %v1641 = vadd.f32 %v1609, %v1620
    %v1642 = vadd.f32 %v1610, %v1622
    %v1643 = vadd.f32 %v1611, %v1624
    %v1644 = vadd.f32 %v1612, %v1626
    %v1645 = vadd.f32 %v1613, %v1628
    %v1646 = vadd.f32 %v1614, %v1630
    %vm1647 = vcmp.gt.f32.partialorder %v1639, 0.0
    %vm1648 = vcmp.gt.f32.partialorder %v1640, 0.0
    %vm1649 = vcmp.gt.f32.partialorder %v1641, 0.0
    %vm1650 = vcmp.gt.f32.partialorder %v1642, 0.0
    %vm1651 = vcmp.gt.f32.partialorder %v1643, 0.0
    %vm1652 = vcmp.gt.f32.partialorder %v1644, 0.0
    %vm1653 = vcmp.gt.f32.partialorder %v1645, 0.0
    %vm1654 = vcmp.gt.f32.partialorder %v1646, 0.0
    %v1655 = vmul.f32 %v1639, 0.2
    %v1656 = vmul.f32 %v1640, 0.2
    %v1657 = vmul.f32 %v1641, 0.2
    %v1658 = vmul.f32 %v1642, 0.2
    %v1659 = vmul.f32 %v1643, 0.2
    %v1660 = vmul.f32 %v1644, 0.2
    %v1661 = vmul.f32 %v1645, 0.2
    %v1662 = vmul.f32 %v1646, 0.2
    %v1663 = vsel %vm1647, %v1639, %v1655
    %v1664 = vsel %vm1648, %v1640, %v1656
    %v1665 = vsel %vm1649, %v1641, %v1657
    %v1666 = vsel %vm1650, %v1642, %v1658
    %v1667 = vsel %vm1651, %v1643, %v1659
    %v1668 = vsel %vm1652, %v1644, %v1660
    %v1669 = vsel %vm1653, %v1645, %v1661
    %v1670 = vsel %vm1654, %v1646, %v1662
    %v1671 = vadd.f32 %v1663, %v63
    %v1672 = vadd.f32 %v1664, %v70
    %v1673 = vadd.f32 %v1665, %v77
    %v1674 = vadd.f32 %v1666, %v84
    %v1675 = vadd.f32 %v1667, %v91
    %v1676 = vadd.f32 %v1668, %v98
    %v1677 = vadd.f32 %v1669, %v105
    %v1678 = vadd.f32 %v1670, %v112
    %vm1679 = vcmask 277768
    %v1680 = vsel %vm1679, %v1671, -inf
    %v1681 = vrot.slane %v1680, 4
    %v1682 = vmax.f32 %v1680, %v1681
    %v1683 = vrot.slane %v1682, 2
    %v1684 = vmax.f32 %v1682, %v1683
    %v1685 = vrot.slane %v1684, 1
    %v1686 = vmax.f32 %v1684, %v1685
    %v1687 = vsel %vm1679, %v1672, -inf
    %v1688 = vrot.slane %v1687, 4
    %v1689 = vmax.f32 %v1687, %v1688
    %v1690 = vrot.slane %v1689, 2
    %v1691 = vmax.f32 %v1689, %v1690
    %v1692 = vrot.slane %v1691, 1
    %v1693 = vmax.f32 %v1691, %v1692
    %v1694 = vsel %vm1679, %v1673, -inf
    %v1695 = vrot.slane %v1694, 4
    %v1696 = vmax.f32 %v1694, %v1695
    %v1697 = vrot.slane %v1696, 2
    %v1698 = vmax.f32 %v1696, %v1697
    %v1699 = vrot.slane %v1698, 1
    %v1700 = vmax.f32 %v1698, %v1699
    %v1701 = vsel %vm1679, %v1674, -inf
    %v1702 = vrot.slane %v1701, 4
    %v1703 = vmax.f32 %v1701, %v1702
    %v1704 = vrot.slane %v1703, 2
    %v1705 = vmax.f32 %v1703, %v1704
    %v1706 = vrot.slane %v1705, 1
    %v1707 = vmax.f32 %v1705, %v1706
    %v1708 = vsel %vm1679, %v1675, -inf
    %v1709 = vrot.slane %v1708, 4
    %v1710 = vmax.f32 %v1708, %v1709
    %v1711 = vrot.slane %v1710, 2
    %v1712 = vmax.f32 %v1710, %v1711
    %v1713 = vrot.slane %v1712, 1
    %v1714 = vmax.f32 %v1712, %v1713
    %v1715 = vsel %vm1679, %v1676, -inf
    %v1716 = vrot.slane %v1715, 4
    %v1717 = vmax.f32 %v1715, %v1716
    %v1718 = vrot.slane %v1717, 2
    %v1719 = vmax.f32 %v1717, %v1718
    %v1720 = vrot.slane %v1719, 1
    %v1721 = vmax.f32 %v1719, %v1720
    %v1722 = vsel %vm1679, %v1677, -inf
    %v1723 = vrot.slane %v1722, 4
    %v1724 = vmax.f32 %v1722, %v1723
    %v1725 = vrot.slane %v1724, 2
    %v1726 = vmax.f32 %v1724, %v1725
    %v1727 = vrot.slane %v1726, 1
    %v1728 = vmax.f32 %v1726, %v1727
    %v1729 = vsel %vm1679, %v1678, -inf
    %v1730 = vrot.slane %v1729, 4
    %v1731 = vmax.f32 %v1729, %v1730
    %v1732 = vrot.slane %v1731, 2
    %v1733 = vmax.f32 %v1731, %v1732
    %v1734 = vrot.slane %v1733, 1
    %v1735 = vmax.f32 %v1733, %v1734
    %v1736 = vsub.f32 %v1671, %v1686
    %v1737 = vsub.f32 %v1672, %v1693
    %v1738 = vsub.f32 %v1673, %v1700
    %v1739 = vsub.f32 %v1674, %v1707
    %v1740 = vsub.f32 %v1675, %v1714
    %v1741 = vsub.f32 %v1676, %v1721
    %v1742 = vsub.f32 %v1677, %v1728
    %v1743 = vsub.f32 %v1678, %v1735
    %v1744 = vmul.f32 %v1736, 1.442695
    %v1745 = vpow.pop %v1744
    %v1746 = vmul.f32 %v1737, 1.442695
    %v1747 = vpow.pop %v1746
    %v1748 = vmul.f32 %v1738, 1.442695
    %v1749 = vpow.pop %v1748
    %v1750 = vmul.f32 %v1739, 1.442695
    %v1751 = vpow.pop %v1750
    %v1752 = vmul.f32 %v1740, 1.442695
    %v1753 = vpow.pop %v1752
    %v1754 = vmul.f32 %v1741, 1.442695
    %v1755 = vpow.pop %v1754
    %v1756 = vmul.f32 %v1742, 1.442695
    %v1757 = vpow.pop %v1756
    %v1758 = vmul.f32 %v1743, 1.442695
    %v1759 = vpow.pop %v1758
    %v1760 = vsel %vm1679, %v1745, 0.0
    %v1761 = vrot.slane %v1760, 4
    %v1762 = vadd.f32 %v1760, %v1761
    %v1763 = vrot.slane %v1762, 2
    %v1764 = vadd.f32 %v1762, %v1763
    %v1765 = vrot.slane %v1764, 1
    %v1766 = vadd.f32 %v1764, %v1765
    %v1767 = vsel %vm1679, %v1747, 0.0
    %v1768 = vrot.slane %v1767, 4
    %v1769 = vadd.f32 %v1767, %v1768
    %v1770 = vrot.slane %v1769, 2
    %v1771 = vadd.f32 %v1769, %v1770
    %v1772 = vrot.slane %v1771, 1
    %v1773 = vadd.f32 %v1771, %v1772
    %v1774 = vsel %vm1679, %v1749, 0.0
    %v1775 = vrot.slane %v1774, 4
    %v1776 = vadd.f32 %v1774, %v1775
    %v1777 = vrot.slane %v1776, 2
    %v1778 = vadd.f32 %v1776, %v1777
    %v1779 = vrot.slane %v1778, 1
    %v1780 = vadd.f32 %v1778, %v1779
    %v1781 = vsel %vm1679, %v1751, 0.0
    %v1782 = vrot.slane %v1781, 4
    %v1783 = vadd.f32 %v1781, %v1782
    %v1784 = vrot.slane %v1783, 2
    %v1785 = vadd.f32 %v1783, %v1784
    %v1786 = vrot.slane %v1785, 1
    %v1787 = vadd.f32 %v1785, %v1786
    %v1788 = vsel %vm1679, %v1753, 0.0
    %v1789 = vrot.slane %v1788, 4
    %v1790 = vadd.f32 %v1788, %v1789
    %v1791 = vrot.slane %v1790, 2
    %v1792 = vadd.f32 %v1790, %v1791
    %v1793 = vrot.slane %v1792, 1
    %v1794 = vadd.f32 %v1792, %v1793
    %v1795 = vsel %vm1679, %v1755, 0.0
    %v1796 = vrot.slane %v1795, 4
    %v1797 = vadd.f32 %v1795, %v1796
    %v1798 = vrot.slane %v1797, 2
    %v1799 = vadd.f32 %v1797, %v1798
    %v1800 = vrot.slane %v1799, 1
    %v1801 = vadd.f32 %v1799, %v1800
    %v1802 = vsel %vm1679, %v1757, 0.0
    %v1803 = vrot.slane %v1802, 4
    %v1804 = vadd.f32 %v1802, %v1803
    %v1805 = vrot.slane %v1804, 2
    %v1806 = vadd.f32 %v1804, %v1805
    %v1807 = vrot.slane %v1806, 1
    %v1808 = vadd.f32 %v1806, %v1807
    %v1809 = vsel %vm1679, %v1759, 0.0
    %v1810 = vrot.slane %v1809, 4
    %v1811 = vadd.f32 %v1809, %v1810
    %v1812 = vrot.slane %v1811, 2
    %v1813 = vadd.f32 %v1811, %v1812
    %v1814 = vrot.slane %v1813, 1
    %v1815 = vadd.f32 %v1813, %v1814
    %v1816 = vrcp.pop %v1766
    %v1817 = vmul.f32 %v1766, %v1816
    %v1818 = vsub.f32 1.0, %v1817
    %v1819 = vmul.f32 %v1816, %v1818
    %v1820 = vadd.f32 %v1816, %v1819
    %vm1821 = vweird.f32 %v1766
    %vm1822 = vweird.f32 %v1816
    %vm1823 = vmor %vm1821, %vm1822
    %v1824 = vsel %vm1823, %v1816, %v1820
    %v1825 = vand.u32 2147483647, %v1766
    %vm1826 = vcmp.eq.f32.partialorder %v1825, 8.507059e+37
    %v1827 = vand.u32 %v1766, 2147483648
    %v1828 = vor.u32 1.1754944e-38, %v1827
    %v1829 = vsel %vm1826, %v1828, %v1824
    %v1830 = vmul.f32 %v1745, %v1829
    %v1831 = vrcp.pop %v1773
    %v1832 = vmul.f32 %v1773, %v1831
    %v1833 = vsub.f32 1.0, %v1832
    %v1834 = vmul.f32 %v1831, %v1833
    %v1835 = vadd.f32 %v1831, %v1834
    %vm1836 = vweird.f32 %v1773
    %vm1837 = vweird.f32 %v1831
    %vm1838 = vmor %vm1836, %vm1837
    %v1839 = vsel %vm1838, %v1831, %v1835
    %v1840 = vand.u32 2147483647, %v1773
    %vm1841 = vcmp.eq.f32.partialorder %v1840, 8.507059e+37
    %v1842 = vand.u32 %v1773, 2147483648
    %v1843 = vor.u32 1.1754944e-38, %v1842
    %v1844 = vsel %vm1841, %v1843, %v1839
    %v1845 = vmul.f32 %v1747, %v1844
    %v1846 = vrcp.pop %v1780
    %v1847 = vmul.f32 %v1780, %v1846
    %v1848 = vsub.f32 1.0, %v1847
    %v1849 = vmul.f32 %v1846, %v1848
    %v1850 = vadd.f32 %v1846, %v1849
    %vm1851 = vweird.f32 %v1780
    %vm1852 = vweird.f32 %v1846
    %vm1853 = vmor %vm1851, %vm1852
    %v1854 = vsel %vm1853, %v1846, %v1850
    %v1855 = vand.u32 2147483647, %v1780
    %vm1856 = vcmp.eq.f32.partialorder %v1855, 8.507059e+37
    %v1857 = vand.u32 %v1780, 2147483648
    %v1858 = vor.u32 1.1754944e-38, %v1857
    %v1859 = vsel %vm1856, %v1858, %v1854
    %v1860 = vmul.f32 %v1749, %v1859
    %v1861 = vrcp.pop %v1787
    %v1862 = vmul.f32 %v1787, %v1861
    %v1863 = vsub.f32 1.0, %v1862
    %v1864 = vmul.f32 %v1861, %v1863
    %v1865 = vadd.f32 %v1861, %v1864
    %vm1866 = vweird.f32 %v1787
    %vm1867 = vweird.f32 %v1861
    %vm1868 = vmor %vm1866, %vm1867
    %v1869 = vsel %vm1868, %v1861, %v1865
    %v1870 = vand.u32 2147483647, %v1787
    %vm1871 = vcmp.eq.f32.partialorder %v1870, 8.507059e+37
    %v1872 = vand.u32 %v1787, 2147483648
    %v1873 = vor.u32 1.1754944e-38, %v1872
    %v1874 = vsel %vm1871, %v1873, %v1869
    %v1875 = vmul.f32 %v1751, %v1874
    %v1876 = vrcp.pop %v1794
    %v1877 = vmul.f32 %v1794, %v1876
    %v1878 = vsub.f32 1.0, %v1877
    %v1879 = vmul.f32 %v1876, %v1878
    %v1880 = vadd.f32 %v1876, %v1879
    %vm1881 = vweird.f32 %v1794
    %vm1882 = vweird.f32 %v1876
    %vm1883 = vmor %vm1881, %vm1882
    %v1884 = vsel %vm1883, %v1876, %v1880
    %v1885 = vand.u32 2147483647, %v1794
    %vm1886 = vcmp.eq.f32.partialorder %v1885, 8.507059e+37
    %v1887 = vand.u32 %v1794, 2147483648
    %v1888 = vor.u32 1.1754944e-38, %v1887
    %v1889 = vsel %vm1886, %v1888, %v1884
    %v1890 = vmul.f32 %v1753, %v1889
    %v1891 = vrcp.pop %v1801
    %v1892 = vmul.f32 %v1801, %v1891
    %v1893 = vsub.f32 1.0, %v1892
    %v1894 = vmul.f32 %v1891, %v1893
    %v1895 = vadd.f32 %v1891, %v1894
    %vm1896 = vweird.f32 %v1801
    %vm1897 = vweird.f32 %v1891
    %vm1898 = vmor %vm1896, %vm1897
    %v1899 = vsel %vm1898, %v1891, %v1895
    %v1900 = vand.u32 2147483647, %v1801
    %vm1901 = vcmp.eq.f32.partialorder %v1900, 8.507059e+37
    %v1902 = vand.u32 %v1801, 2147483648
    %v1903 = vor.u32 1.1754944e-38, %v1902
    %v1904 = vsel %vm1901, %v1903, %v1899
    %v1905 = vmul.f32 %v1755, %v1904
    %v1906 = vrcp.pop %v1808
    %v1907 = vmul.f32 %v1808, %v1906
    %v1908 = vsub.f32 1.0, %v1907
    %v1909 = vmul.f32 %v1906, %v1908
    %v1910 = vadd.f32 %v1906, %v1909
    %vm1911 = vweird.f32 %v1808
    %vm1912 = vweird.f32 %v1906
    %vm1913 = vmor %vm1911, %vm1912
    %v1914 = vsel %vm1913, %v1906, %v1910
    %v1915 = vand.u32 2147483647, %v1808
    %vm1916 = vcmp.eq.f32.partialorder %v1915, 8.507059e+37
    %v1917 = vand.u32 %v1808, 2147483648
    %v1918 = vor.u32 1.1754944e-38, %v1917
    %v1919 = vsel %vm1916, %v1918, %v1914
    %v1920 = vmul.f32 %v1757, %v1919
    %v1921 = vrcp.pop %v1815
    %v1922 = vmul.f32 %v1815, %v1921
    %v1923 = vsub.f32 1.0, %v1922
    %v1924 = vmul.f32 %v1921, %v1923
    %v1925 = vadd.f32 %v1921, %v1924
    %vm1926 = vweird.f32 %v1815
    %vm1927 = vweird.f32 %v1921
    %vm1928 = vmor %vm1926, %vm1927
    %v1929 = vsel %vm1928, %v1921, %v1925
    %v1930 = vand.u32 2147483647, %v1815
    %vm1931 = vcmp.eq.f32.partialorder %v1930, 8.507059e+37
    %v1932 = vand.u32 %v1815, 2147483648
    %v1933 = vor.u32 1.1754944e-38, %v1932
    %v1934 = vsel %vm1931, %v1933, %v1929
    %v1935 = vmul.f32 %v1759, %v1934
    %1936 = vrot.lane.b32.xlu0 %v1578, 72
    %v1937 = vpop.permute.xlu0 %1936
    %v1939 = vadd.f32 %v157, %v1937
    %v1940 = vadd.f32 %v160, %v1937
    %v1941 = vadd.f32 %v163, %v1937
    %v1942 = vadd.f32 %v166, %v1937
    %v1943 = vadd.f32 %v169, %v1937
    %v1944 = vadd.f32 %v172, %v1937
    %v1945 = vadd.f32 %v175, %v1937
    %v1946 = vadd.f32 %v178, %v1937
    %1948 = vset.pattern.permute.xlu0 33
    %1949 = vperm.xlu0 %1948, %v1830
    %v1950 = vpop.permute.xlu0 %1949
    %1953 = vset.pattern.permute.xlu0 33
    %1954 = vperm.xlu0 %1953, %v1845
    %v1955 = vpop.permute.xlu0 %1954
    %1958 = vset.pattern.permute.xlu0 33
    %1959 = vperm.xlu0 %1958, %v1860
    %v1960 = vpop.permute.xlu0 %1959
    %1963 = vset.pattern.permute.xlu0 33
    %1964 = vperm.xlu0 %1963, %v1875
    %v1965 = vpop.permute.xlu0 %1964
    %1968 = vset.pattern.permute.xlu0 33
    %1969 = vperm.xlu0 %1968, %v1890
    %v1970 = vpop.permute.xlu0 %1969
    %1973 = vset.pattern.permute.xlu0 33
    %1974 = vperm.xlu0 %1973, %v1905
    %v1975 = vpop.permute.xlu0 %1974
    %1978 = vset.pattern.permute.xlu0 33
    %1979 = vperm.xlu0 %1978, %v1920
    %v1980 = vpop.permute.xlu0 %1979
    %1983 = vset.pattern.permute.xlu0 33
    %1984 = vperm.xlu0 %1983, %v1935
    %v1985 = vpop.permute.xlu0 %1984
    %v1987 = vmul.f32 %v1950, %v1939
    %v1988 = vmul.f32 %v1955, %v1940
    %v1989 = vmul.f32 %v1960, %v1941
    %v1990 = vmul.f32 %v1965, %v1942
    %v1991 = vmul.f32 %v1970, %v1943
    %v1992 = vmul.f32 %v1975, %v1944
    %v1993 = vmul.f32 %v1980, %v1945
    %v1994 = vmul.f32 %v1985, %v1946
    %vm1995 = vcmask 851520
    %v1996 = vsel %vm1995, %v1987, 0.0
    %v1997 = vrot.slane %v1996, 4
    %v1998 = vadd.f32 %v1996, %v1997
    %v1999 = vrot.slane %v1998, 2
    %v2000 = vadd.f32 %v1998, %v1999
    %v2001 = vrot.slane %v2000, 1
    %v2002 = vadd.f32 %v2000, %v2001
    %v2003 = vsel %vm1995, %v1988, 0.0
    %v2004 = vrot.slane %v2003, 4
    %v2005 = vadd.f32 %v2003, %v2004
    %v2006 = vrot.slane %v2005, 2
    %v2007 = vadd.f32 %v2005, %v2006
    %v2008 = vrot.slane %v2007, 1
    %v2009 = vadd.f32 %v2007, %v2008
    %v2010 = vsel %vm1995, %v1989, 0.0
    %v2011 = vrot.slane %v2010, 4
    %v2012 = vadd.f32 %v2010, %v2011
    %v2013 = vrot.slane %v2012, 2
    %v2014 = vadd.f32 %v2012, %v2013
    %v2015 = vrot.slane %v2014, 1
    %v2016 = vadd.f32 %v2014, %v2015
    %v2017 = vsel %vm1995, %v1990, 0.0
    %v2018 = vrot.slane %v2017, 4
    %v2019 = vadd.f32 %v2017, %v2018
    %v2020 = vrot.slane %v2019, 2
    %v2021 = vadd.f32 %v2019, %v2020
    %v2022 = vrot.slane %v2021, 1
    %v2023 = vadd.f32 %v2021, %v2022
    %v2024 = vsel %vm1995, %v1991, 0.0
    %v2025 = vrot.slane %v2024, 4
    %v2026 = vadd.f32 %v2024, %v2025
    %v2027 = vrot.slane %v2026, 2
    %v2028 = vadd.f32 %v2026, %v2027
    %v2029 = vrot.slane %v2028, 1
    %v2030 = vadd.f32 %v2028, %v2029
    %v2031 = vsel %vm1995, %v1992, 0.0
    %v2032 = vrot.slane %v2031, 4
    %v2033 = vadd.f32 %v2031, %v2032
    %v2034 = vrot.slane %v2033, 2
    %v2035 = vadd.f32 %v2033, %v2034
    %v2036 = vrot.slane %v2035, 1
    %v2037 = vadd.f32 %v2035, %v2036
    %v2038 = vsel %vm1995, %v1993, 0.0
    %v2039 = vrot.slane %v2038, 4
    %v2040 = vadd.f32 %v2038, %v2039
    %v2041 = vrot.slane %v2040, 2
    %v2042 = vadd.f32 %v2040, %v2041
    %v2043 = vrot.slane %v2042, 1
    %v2044 = vadd.f32 %v2042, %v2043
    %v2045 = vsel %vm1995, %v1994, 0.0
    %v2046 = vrot.slane %v2045, 4
    %v2047 = vadd.f32 %v2045, %v2046
    %v2048 = vrot.slane %v2047, 2
    %v2049 = vadd.f32 %v2047, %v2048
    %v2050 = vrot.slane %v2049, 1
    %v2051 = vadd.f32 %v2049, %v2050
    %v2052 = vld [vmem:[%s12] sm:$0x1]
    %v2054 = vperm.slane %v2052, 0
    %2055 = vrot.lane.b32.xlu0 %v2054, 72
    %v2056 = vpop.permute.xlu0 %2055
    %v2058 = vadd.f32 %v2002, %v2056
    %v2059 = vadd.f32 %v2009, %v2056
    %v2060 = vadd.f32 %v2016, %v2056
    %v2061 = vadd.f32 %v2023, %v2056
    %v2062 = vadd.f32 %v2030, %v2056
    %v2063 = vadd.f32 %v2037, %v2056
    %v2064 = vadd.f32 %v2044, %v2056
    %v2065 = vadd.f32 %v2051, %v2056
    %v2066 = vmul.f32 %v2058, 1.442695
    %v2067 = vpow.pop %v2066
    %v2068 = vmul.f32 %v2059, 1.442695
    %v2069 = vpow.pop %v2068
    %v2070 = vmul.f32 %v2060, 1.442695
    %v2071 = vpow.pop %v2070
    %v2072 = vmul.f32 %v2061, 1.442695
    %v2073 = vpow.pop %v2072
    %v2074 = vmul.f32 %v2062, 1.442695
    %v2075 = vpow.pop %v2074
    %v2076 = vmul.f32 %v2063, 1.442695
    %v2077 = vpow.pop %v2076
    %v2078 = vmul.f32 %v2064, 1.442695
    %v2079 = vpow.pop %v2078
    %v2080 = vmul.f32 %v2065, 1.442695
    %v2081 = vpow.pop %v2080
    %v2082 = vsub.f32 %v2067, 1.0
    %v2083 = vsub.f32 %v2069, 1.0
    %v2084 = vsub.f32 %v2071, 1.0
    %v2085 = vsub.f32 %v2073, 1.0
    %v2086 = vsub.f32 %v2075, 1.0
    %v2087 = vsub.f32 %v2077, 1.0
    %v2088 = vsub.f32 %v2079, 1.0
    %v2089 = vsub.f32 %v2081, 1.0
    %v2090 = vand.u32 2147483647, %v2058
    %v2091 = vand.u32 2147483647, %v2059
    %v2092 = vand.u32 2147483647, %v2060
    %v2093 = vand.u32 2147483647, %v2061
    %v2094 = vand.u32 2147483647, %v2062
    %v2095 = vand.u32 2147483647, %v2063
    %v2096 = vand.u32 2147483647, %v2064
    %v2097 = vand.u32 2147483647, %v2065
    %vm2098 = vcmp.lt.f32.partialorder %v2090, 0.001
    %vm2099 = vcmp.lt.f32.partialorder %v2091, 0.001
    %vm2100 = vcmp.lt.f32.partialorder %v2092, 0.001
    %vm2101 = vcmp.lt.f32.partialorder %v2093, 0.001
    %vm2102 = vcmp.lt.f32.partialorder %v2094, 0.001
    %vm2103 = vcmp.lt.f32.partialorder %v2095, 0.001
    %vm2104 = vcmp.lt.f32.partialorder %v2096, 0.001
    %vm2105 = vcmp.lt.f32.partialorder %v2097, 0.001
    %v2106 = vmul.f32 %v2058, 0.5
    %v2107 = vmul.f32 %v2059, 0.5
    %v2108 = vmul.f32 %v2060, 0.5
    %v2109 = vmul.f32 %v2061, 0.5
    %v2110 = vmul.f32 %v2062, 0.5
    %v2111 = vmul.f32 %v2063, 0.5
    %v2112 = vmul.f32 %v2064, 0.5
    %v2113 = vmul.f32 %v2065, 0.5
    %v2114 = vmul.f32 %v2106, %v2058
    %v2115 = vmul.f32 %v2107, %v2059
    %v2116 = vmul.f32 %v2108, %v2060
    %v2117 = vmul.f32 %v2109, %v2061
    %v2118 = vmul.f32 %v2110, %v2062
    %v2119 = vmul.f32 %v2111, %v2063
    %v2120 = vmul.f32 %v2112, %v2064
    %v2121 = vmul.f32 %v2113, %v2065
    %v2122 = vadd.f32 %v2058, %v2114
    %v2123 = vadd.f32 %v2059, %v2115
    %v2124 = vadd.f32 %v2060, %v2116
    %v2125 = vadd.f32 %v2061, %v2117
    %v2126 = vadd.f32 %v2062, %v2118
    %v2127 = vadd.f32 %v2063, %v2119
    %v2128 = vadd.f32 %v2064, %v2120
    %v2129 = vadd.f32 %v2065, %v2121
    %v2130 = vsel %vm2098, %v2122, %v2082
    %v2131 = vsel %vm2099, %v2123, %v2083
    %v2132 = vsel %vm2100, %v2124, %v2084
    %v2133 = vsel %vm2101, %v2125, %v2085
    %v2134 = vsel %vm2102, %v2126, %v2086
    %v2135 = vsel %vm2103, %v2127, %v2087
    %v2136 = vsel %vm2104, %v2128, %v2088
    %v2137 = vsel %vm2105, %v2129, %v2089
    %vm2138 = vcmp.gt.f32.partialorder %v2058, 0.0
    %vm2139 = vcmp.gt.f32.partialorder %v2059, 0.0
    %vm2140 = vcmp.gt.f32.partialorder %v2060, 0.0
    %vm2141 = vcmp.gt.f32.partialorder %v2061, 0.0
    %vm2142 = vcmp.gt.f32.partialorder %v2062, 0.0
    %vm2143 = vcmp.gt.f32.partialorder %v2063, 0.0
    %vm2144 = vcmp.gt.f32.partialorder %v2064, 0.0
    %vm2145 = vcmp.gt.f32.partialorder %v2065, 0.0
    %v2146 = vsel %vm2138, %v2058, %v2130
    %v2147 = vsel %vm2139, %v2059, %v2131
    %v2148 = vsel %vm2140, %v2060, %v2132
    %v2149 = vsel %vm2141, %v2061, %v2133
    %v2150 = vsel %vm2142, %v2062, %v2134
    %v2151 = vsel %vm2143, %v2063, %v2135
    %v2152 = vsel %vm2144, %v2064, %v2136
    %v2153 = vsel %vm2145, %v2065, %v2137
    %v2162 = vrot.slane %v2147, 7
    %v2163 = vsel %vm843, %v2162, %v2146
    %v2164 = vrot.slane %v2148, 6
    %v2165 = vsel %vm846, %v2164, %v2163
    %v2166 = vrot.slane %v2149, 5
    %v2167 = vsel %vm849, %v2166, %v2165
    %v2168 = vrot.slane %v2150, 4
    %v2169 = vsel %vm852, %v2168, %v2167
    %v2170 = vrot.slane %v2151, 3
    %v2171 = vsel %vm855, %v2170, %v2169
    %v2172 = vrot.slane %v2152, 2
    %v2173 = vsel %vm858, %v2172, %v2171
    %v2174 = vrot.slane %v2153, 1
    %v2175 = vsel %vm861, %v2174, %v2173
    %2176 = vrot.lane.b32.xlu0 %v2175, 56
    %v2177 = vpop.permute.xlu0 %2176
    %2179 = vst.msk [vmem:[#allocation2] sm:$0xff] %vm673, %v2177
    // Predicated region
    $region54: #{multi_layer_edge_gat.1} parent=1 // pred_check
      _
    $region55: #{multi_layer_edge_gat.1} parent=1 // pred_check_branch
      %2181 = sbr.rel (0) target = $region57
    $region56: #{multi_layer_edge_gat.1} parent=1 // pred_region
      %2183 = vsyncadd [#allocation3], 0
      %s2185 = sshll.u32 [#allocation2], 4
      %s2186 = int_to_ptr.vmem [resolvable:$true] %s2185
      %s2187 = sshll.u32 %s13, 4
      %s2188 = int_to_ptr.hbm [resolvable:$true] %s2187
      %2190 = dma.vmem_to_hbm [thread:$0]  %s2186, 128, %s2188, [#allocation3]
    $region57: #{multi_layer_edge_gat.1} parent=1 // pred_fallthru
      _
    // Predicated region
    $region58: #{multi_layer_edge_gat.1} parent=1 // pred_check
      _
    $region59: #{multi_layer_edge_gat.1} parent=1 // pred_check_branch
      %2192 = sbr.rel (0) target = $region61
    $region60: #{multi_layer_edge_gat.1} parent=1 // pred_region
      %2194 = dma.done [#allocation3], 128
    $region61: #{multi_layer_edge_gat.1} parent=1 // pred_fallthru
      _
    %2195 = vsyncpa [#allocation3], 1

</llo_original>
